<compile_context>
chip_gen: v7x
topology: tpu7x:2x2x1
jax: 0.10.0
libtpu: 0.0.40
codegen_flags: <defaults>
</compile_context>

<pallas_src>
import functools

import jax
import jax.numpy as jnp
from jax.experimental import pallas as pl
from jax.experimental.pallas import tpu as pltpu

# --- CFG stand-in (LunarLander-v2: 8-dim observation, 4 discrete actions) ---
X_DIM = 8
Y_DIM = 4
H1, H2, H3 = 64, 64, 32
OUT_PAD = 128  # lane-dense output width (last layer zero-padded 4 -> 128)

_PREC = jax.lax.Precision.HIGHEST  # exact f32 nn.Linear semantics


def dqn_kernel(obs_ref,
               w1_ref, b1_ref,
               w2_ref, b2_ref,
               w3_ref, b3_ref,
               w4_ref, b4_ref,
               out_ref):
    """Fused 4-layer MLP forward on one batch tile: (Linear+ReLU)x3 + Linear."""
    x = obs_ref[...].astype(jnp.float32)

    # Layer 1: x_dim -> 64, ReLU
    h = jnp.dot(x, w1_ref[...], precision=_PREC,
                preferred_element_type=jnp.float32) + b1_ref[...]
    h = jnp.maximum(h, 0.0)

    # Layer 2: 64 -> 64, ReLU
    h = jnp.dot(h, w2_ref[...], precision=_PREC,
                preferred_element_type=jnp.float32) + b2_ref[...]
    h = jnp.maximum(h, 0.0)

    # Layer 3: 64 -> 32, ReLU
    h = jnp.dot(h, w3_ref[...], precision=_PREC,
                preferred_element_type=jnp.float32) + b3_ref[...]
    h = jnp.maximum(h, 0.0)

    # Layer 4: 32 -> 128 (cols 4..127 are zero-padded weights; raw Q in 0..3).
    # Produces a full 128-lane tile -> unmasked, lane-dense store.
    q = jnp.dot(h, w4_ref[...], precision=_PREC,
                preferred_element_type=jnp.float32) + b4_ref[...]

    out_ref[...] = q.astype(out_ref.dtype)


def _round_up(x, m):
    return ((x + m - 1) // m) * m


@functools.partial(jax.jit, static_argnames=("batch_tile",))
def dqn_forward(obs, params, *, batch_tile=2048):
    """obs: (batch, X_DIM) float32. params: dict of (in,out) weights / (1,out) biases."""
    batch = obs.shape[0]

    if batch < 16:
        # Acting-size batch: one tile covering the whole array (block == full
        # array, so no (8,)-divisibility requirement applies). Too small to be
        # worth splitting across TensorCores.
        tb = batch
        padded = batch
    else:
        cap = max(8, (batch_tile // 8) * 8)
        if batch % 16 == 0 and batch // 2 <= cap:
            # Exactly two balanced tiles, no padding: keeps both v7x TCs busy
            # and avoids the wrapper-side jnp.pad copy for power-of-two
            # replay-buffer batches.
            tb = batch // 2
        else:
            # >= 2 tiles, tile capped at batch_tile, kept a multiple of 8.
            tb = max(8, min(cap, _round_up(pl.cdiv(batch, 2), 8)))
        padded = _round_up(batch, tb)

    obs_p = obs if padded == batch else jnp.pad(obs, ((0, padded - batch), (0, 0)))
    grid = (padded // tb,)

    # Zero-pad the final layer to 128 output features so the kernel's output
    # block is lane-dense (unmasked stores + dense writeback DMA). Tiny
    # (32x128 / 1x128) one-off ops under jit.
    w4p = jnp.pad(params["w4"], ((0, 0), (0, OUT_PAD - Y_DIM)))
    b4p = jnp.pad(params["b4"], ((0, 0), (0, OUT_PAD - Y_DIM)))

    def tiled(shape):
        # obs / out: march along the batch axis with the grid index.
        return pl.BlockSpec(shape, lambda i: (i, 0))

    def pinned(shape):
        # weights / biases: constant block index -> DMA'd once, stays in VMEM.
        return pl.BlockSpec(shape, lambda i: (0, 0))

    in_specs = [
        tiled((tb, X_DIM)),
        pinned((X_DIM, H1)),   pinned((1, H1)),
        pinned((H1, H2)),      pinned((1, H2)),
        pinned((H2, H3)),      pinned((1, H3)),
        pinned((H3, OUT_PAD)), pinned((1, OUT_PAD)),
    ]
    out_specs = pl.BlockSpec((tb, OUT_PAD), lambda i: (i, 0))

    out = pl.pallas_call(
        dqn_kernel,
        out_shape=jax.ShapeDtypeStruct((padded, OUT_PAD), jnp.float32),
        grid=grid,
        in_specs=in_specs,
        out_specs=out_specs,
        compiler_params=pltpu.CompilerParams(
            dimension_semantics=("parallel",)),  # shards batch tiles across TCs on v7x
    )(
        obs_p,
        params["w1"], params["b1"],
        params["w2"], params["b2"],
        params["w3"], params["b3"],
        w4p, b4p,
    )
    return out[:batch, :Y_DIM]


def init_params(key):
    """Deterministic init mirroring torch.nn.Linear's U(-1/sqrt(fan_in), +...).

    Weights stored as (in_features, out_features) for the x @ W convention.
    """
    dims = [(X_DIM, H1), (H1, H2), (H2, H3), (H3, Y_DIM)]
    params = {}
    for idx, (fan_in, fan_out) in enumerate(dims, start=1):
        key, kw, kb = jax.random.split(key, 3)
        bound = 1.0 / jnp.sqrt(jnp.float32(fan_in))
        params[f"w{idx}"] = jax.random.uniform(
            kw, (fan_in, fan_out), jnp.float32, minval=-bound, maxval=bound)
        params[f"b{idx}"] = jax.random.uniform(
            kb, (1, fan_out), jnp.float32, minval=-bound, maxval=bound)
    return params


def dqn_reference(obs, params):
    """Plain-JAX reference of the same forward pass (same f32 precision)."""
    def lin(x, w, b):
        return jnp.dot(x, w, precision=_PREC) + b
    h = jnp.maximum(lin(obs, params["w1"], params["b1"]), 0.0)
    h = jnp.maximum(lin(h, params["w2"], params["b2"]), 0.0)
    h = jnp.maximum(lin(h, params["w3"], params["b3"]), 0.0)
    return lin(h, params["w4"], params["b4"])


if __name__ == "__main__":
    key = jax.random.PRNGKey(0)
    key, k_small, k_big, k_pow2 = jax.random.split(key, 4)
    params = init_params(key)

    # Small acting-size batch (single-tile path, block == full array).
    obs_small = jax.random.normal(k_small, (2, X_DIM), jnp.float32)
    q_small = dqn_forward(obs_small, params)
    jax.block_until_ready(q_small)
    assert q_small.shape == (2, Y_DIM)
    assert jnp.allclose(q_small, dqn_reference(obs_small, params),
                        atol=1e-5, rtol=1e-5)

    # Replay-buffer-size batch, non-multiple of 16 (exercises the batch-tiled,
    # pipelined, parallel grid path with minimal padding + slice).
    obs_big = jax.random.normal(k_big, (1000, X_DIM), jnp.float32)
    q_big = dqn_forward(obs_big, params, batch_tile=256)
    jax.block_until_ready(q_big)
    assert q_big.shape == (1000, Y_DIM)
    assert jnp.allclose(q_big, dqn_reference(obs_big, params),
                        atol=1e-5, rtol=1e-5)

    # Power-of-two replay batch: two balanced tiles, no padding copy.
    obs_pow2 = jax.random.normal(k_pow2, (512, X_DIM), jnp.float32)
    q_pow2 = dqn_forward(obs_pow2, params)
    jax.block_until_ready(q_pow2)
    assert q_pow2.shape == (512, Y_DIM)
    assert jnp.allclose(q_pow2, dqn_reference(obs_pow2, params),
                        atol=1e-5, rtol=1e-5)

    print("KERNEL_OK")
</pallas_src>

<mosaic_0001>
module attributes {stable_mosaic.version = 11 : i64} {
  func.func @dqn_kernel(%arg0: i32, %arg1: memref<2x8xf32, #tpu.memory_space<vmem>>, %arg2: memref<8x64xf32, #tpu.memory_space<vmem>>, %arg3: memref<1x64xf32, #tpu.memory_space<vmem>>, %arg4: memref<64x64xf32, #tpu.memory_space<vmem>>, %arg5: memref<1x64xf32, #tpu.memory_space<vmem>>, %arg6: memref<64x32xf32, #tpu.memory_space<vmem>>, %arg7: memref<1x32xf32, #tpu.memory_space<vmem>>, %arg8: memref<32x128xf32, #tpu.memory_space<vmem>>, %arg9: memref<1x128xf32, #tpu.memory_space<vmem>>, %arg10: memref<2x128xf32, #tpu.memory_space<vmem>>) attributes {dimension_semantics = [#tpu.dimension_semantics<parallel>], iteration_bounds = array<i64: 1>, scalar_prefetch = 0 : i64, scratch_operands = 0 : i64, tpu.core_type = #tpu.core_type<tc>, window_params = [{transform_indices = @transform_0, window_bounds = array<i64: 2, 8>}, {pipeline_mode = #tpu.pipeline_mode<synchronous>, transform_indices = @transform_1, window_bounds = array<i64: 8, 64>}, {pipeline_mode = #tpu.pipeline_mode<synchronous>, transform_indices = @transform_2, window_bounds = array<i64: 1, 64>}, {pipeline_mode = #tpu.pipeline_mode<synchronous>, transform_indices = @transform_3, window_bounds = array<i64: 64, 64>}, {pipeline_mode = #tpu.pipeline_mode<synchronous>, transform_indices = @transform_4, window_bounds = array<i64: 1, 64>}, {pipeline_mode = #tpu.pipeline_mode<synchronous>, transform_indices = @transform_5, window_bounds = array<i64: 64, 32>}, {pipeline_mode = #tpu.pipeline_mode<synchronous>, transform_indices = @transform_6, window_bounds = array<i64: 1, 32>}, {pipeline_mode = #tpu.pipeline_mode<synchronous>, transform_indices = @transform_7, window_bounds = array<i64: 32, 128>}, {pipeline_mode = #tpu.pipeline_mode<synchronous>, transform_indices = @transform_8, window_bounds = array<i64: 1, 128>}, {transform_indices = @transform_9, window_bounds = array<i64: 2, 128>}]} {
    %c0 = arith.constant 0 : index
    %c0_0 = arith.constant 0 : index
    %0 = vector.load %arg1[%c0, %c0_0] : memref<2x8xf32, #tpu.memory_space<vmem>>, vector<2x8xf32>
    %c0_1 = arith.constant 0 : index
    %c0_2 = arith.constant 0 : index
    %1 = vector.load %arg2[%c0_1, %c0_2] : memref<8x64xf32, #tpu.memory_space<vmem>>, vector<8x64xf32>
    %cst = arith.constant dense<0.000000e+00> : vector<2x64xf32>
    %2 = tpu.matmul %0, %1, %cst {dimension_numbers = #tpu.dot_dimension_numbers<[1], [0], [0], [1], [0, 0, 1, 1], [], []>, precision = #tpu.contract_precision<fp32>} : vector<2x8xf32>, vector<8x64xf32>, vector<2x64xf32> -> vector<2x64xf32>
    %c0_3 = arith.constant 0 : index
    %c0_4 = arith.constant 0 : index
    %3 = vector.load %arg3[%c0_3, %c0_4] : memref<1x64xf32, #tpu.memory_space<vmem>>, vector<1x64xf32>
    %4 = vector.broadcast %3 : vector<1x64xf32> to vector<2x64xf32>
    %5 = arith.addf %2, %4 : vector<2x64xf32>
    %cst_5 = arith.constant 0.000000e+00 : f32
    %6 = vector.broadcast %cst_5 : f32 to vector<2x64xf32>
    %7 = arith.maximumf %5, %6 : vector<2x64xf32>
    %c0_6 = arith.constant 0 : index
    %c0_7 = arith.constant 0 : index
    %8 = vector.load %arg4[%c0_6, %c0_7] : memref<64x64xf32, #tpu.memory_space<vmem>>, vector<64x64xf32>
    %cst_8 = arith.constant dense<0.000000e+00> : vector<2x64xf32>
    %9 = tpu.matmul %7, %8, %cst_8 {dimension_numbers = #tpu.dot_dimension_numbers<[1], [0], [0], [1], [0, 0, 1, 1], [], []>, precision = #tpu.contract_precision<fp32>} : vector<2x64xf32>, vector<64x64xf32>, vector<2x64xf32> -> vector<2x64xf32>
    %c0_9 = arith.constant 0 : index
    %c0_10 = arith.constant 0 : index
    %10 = vector.load %arg5[%c0_9, %c0_10] : memref<1x64xf32, #tpu.memory_space<vmem>>, vector<1x64xf32>
    %11 = vector.broadcast %10 : vector<1x64xf32> to vector<2x64xf32>
    %12 = arith.addf %9, %11 : vector<2x64xf32>
    %cst_11 = arith.constant 0.000000e+00 : f32
    %13 = vector.broadcast %cst_11 : f32 to vector<2x64xf32>
    %14 = arith.maximumf %12, %13 : vector<2x64xf32>
    %c0_12 = arith.constant 0 : index
    %c0_13 = arith.constant 0 : index
    %15 = vector.load %arg6[%c0_12, %c0_13] : memref<64x32xf32, #tpu.memory_space<vmem>>, vector<64x32xf32>
    %cst_14 = arith.constant dense<0.000000e+00> : vector<2x32xf32>
    %16 = tpu.matmul %14, %15, %cst_14 {dimension_numbers = #tpu.dot_dimension_numbers<[1], [0], [0], [1], [0, 0, 1, 1], [], []>, precision = #tpu.contract_precision<fp32>} : vector<2x64xf32>, vector<64x32xf32>, vector<2x32xf32> -> vector<2x32xf32>
    %c0_15 = arith.constant 0 : index
    %c0_16 = arith.constant 0 : index
    %17 = vector.load %arg7[%c0_15, %c0_16] : memref<1x32xf32, #tpu.memory_space<vmem>>, vector<1x32xf32>
    %18 = vector.broadcast %17 : vector<1x32xf32> to vector<2x32xf32>
    %19 = arith.addf %16, %18 : vector<2x32xf32>
    %cst_17 = arith.constant 0.000000e+00 : f32
    %20 = vector.broadcast %cst_17 : f32 to vector<2x32xf32>
    %21 = arith.maximumf %19, %20 : vector<2x32xf32>
    %c0_18 = arith.constant 0 : index
    %c0_19 = arith.constant 0 : index
    %22 = vector.load %arg8[%c0_18, %c0_19] : memref<32x128xf32, #tpu.memory_space<vmem>>, vector<32x128xf32>
    %cst_20 = arith.constant dense<0.000000e+00> : vector<2x128xf32>
    %23 = tpu.matmul %21, %22, %cst_20 {dimension_numbers = #tpu.dot_dimension_numbers<[1], [0], [0], [1], [0, 0, 1, 1], [], []>, precision = #tpu.contract_precision<fp32>} : vector<2x32xf32>, vector<32x128xf32>, vector<2x128xf32> -> vector<2x128xf32>
    %c0_21 = arith.constant 0 : index
    %c0_22 = arith.constant 0 : index
    %24 = vector.load %arg9[%c0_21, %c0_22] : memref<1x128xf32, #tpu.memory_space<vmem>>, vector<1x128xf32>
    %25 = vector.broadcast %24 : vector<1x128xf32> to vector<2x128xf32>
    %26 = arith.addf %23, %25 : vector<2x128xf32>
    %c0_23 = arith.constant 0 : index
    %c0_24 = arith.constant 0 : index
    %27 = vector.load %arg10[%c0_23, %c0_24] : memref<2x128xf32, #tpu.memory_space<vmem>>, vector<2x128xf32>
    tpu.vector_store %arg10[%c0_23, %c0_24], %26 {strides = array<i32>} : memref<2x128xf32, #tpu.memory_space<vmem>>, vector<2x128xf32>,
    return
  }
  func.func @transform_0(%arg0: i32) -> (i32, i32) {
    %c0_i32 = arith.constant 0 : i32
    %c0_i32_0 = arith.constant 0 : i32
    return %arg0, %c0_i32 : i32, i32
  }
  func.func @transform_1(%arg0: i32) -> (i32, i32) {
    %c0_i32 = arith.constant 0 : i32
    %c0_i32_0 = arith.constant 0 : i32
    %c0_i32_1 = arith.constant 0 : i32
    return %c0_i32, %c0_i32_0 : i32, i32
  }
  func.func @transform_2(%arg0: i32) -> (i32, i32) {
    %c0_i32 = arith.constant 0 : i32
    %c0_i32_0 = arith.constant 0 : i32
    %c0_i32_1 = arith.constant 0 : i32
    return %c0_i32, %c0_i32_0 : i32, i32
  }
  func.func @transform_3(%arg0: i32) -> (i32, i32) {
    %c0_i32 = arith.constant 0 : i32
    %c0_i32_0 = arith.constant 0 : i32
    %c0_i32_1 = arith.constant 0 : i32
    return %c0_i32, %c0_i32_0 : i32, i32
  }
  func.func @transform_4(%arg0: i32) -> (i32, i32) {
    %c0_i32 = arith.constant 0 : i32
    %c0_i32_0 = arith.constant 0 : i32
    %c0_i32_1 = arith.constant 0 : i32
    return %c0_i32, %c0_i32_0 : i32, i32
  }
  func.func @transform_5(%arg0: i32) -> (i32, i32) {
    %c0_i32 = arith.constant 0 : i32
    %c0_i32_0 = arith.constant 0 : i32
    %c0_i32_1 = arith.constant 0 : i32
    return %c0_i32, %c0_i32_0 : i32, i32
  }
  func.func @transform_6(%arg0: i32) -> (i32, i32) {
    %c0_i32 = arith.constant 0 : i32
    %c0_i32_0 = arith.constant 0 : i32
    %c0_i32_1 = arith.constant 0 : i32
    return %c0_i32, %c0_i32_0 : i32, i32
  }
  func.func @transform_7(%arg0: i32) -> (i32, i32) {
    %c0_i32 = arith.constant 0 : i32
    %c0_i32_0 = arith.constant 0 : i32
    %c0_i32_1 = arith.constant 0 : i32
    return %c0_i32, %c0_i32_0 : i32, i32
  }
  func.func @transform_8(%arg0: i32) -> (i32, i32) {
    %c0_i32 = arith.constant 0 : i32
    %c0_i32_0 = arith.constant 0 : i32
    %c0_i32_1 = arith.constant 0 : i32
    return %c0_i32, %c0_i32_0 : i32, i32
  }
  func.func @transform_9(%arg0: i32) -> (i32, i32) {
    %c0_i32 = arith.constant 0 : i32
    %c0_i32_0 = arith.constant 0 : i32
    return %arg0, %c0_i32 : i32, i32
  }
}

</mosaic_0001>

<llo_original>
// kernel: dqn_forward.1
$region0: #{dqn_forward.1}
  #allocation0 [shape = 'u32[]', space=smem, size = 0x4, offset = 0x4, fixed_abs, tag = 'smem constant byte address 0x4 - core index']
  #allocation1 [shape = 'u32[144,128]{1,0:T(1,128)}', space=vmem, size = 0x12000, scoped, tag = 'internal scratch']
  %s0 = inlined_call_operand.vmem [shape: f32[2,8], index: 0, kind: input, shape index: {}]
  %s1 = inlined_call_operand.vmem [shape: f32[8,64], index: 1, kind: input, shape index: {}]
  %s2 = inlined_call_operand.vmem [shape: f32[1,64], index: 2, kind: input, shape index: {}]
  %s3 = inlined_call_operand.vmem [shape: f32[64,64], index: 3, kind: input, shape index: {}]
  %s4 = inlined_call_operand.vmem [shape: f32[1,64], index: 4, kind: input, shape index: {}]
  %s5 = inlined_call_operand.vmem [shape: f32[64,32], index: 5, kind: input, shape index: {}]
  %s6 = inlined_call_operand.vmem [shape: f32[1,32], index: 6, kind: input, shape index: {}]
  %s7 = inlined_call_operand.vmem [shape: f32[32,128], index: 7, kind: input, shape index: {}]
  %s8 = inlined_call_operand.vmem [shape: f32[1,128], index: 8, kind: input, shape index: {}]
  %s9 = inlined_call_operand.hbm [shape: f32[2,128], index: 9, kind: output, shape index: {}]
  %s10 = sld [smem:[#allocation0]]
  $region46: #{dqn_forward.1} parent=0
    _
  %s12 = ssub.s32 1, %s10
  %s13 = scalar_select 0, %s12, %s10
  $region1: #{dqn_forward.1} parent=0
    #allocation2 [shape = 'u8[1024]{0}', space=vmem, size = 0x400, scoped, tag = 'output window, operand 0, single buffered']
    #allocation3 [shape = 's32[1]{0}', space=sflag, size = 0x4, scoped, tag = 'scoped memory for dqn_forward.1']
    %14 = vsyncpa [#allocation3], 0
    // Predicated region
    $region2: #{dqn_forward.1} parent=1 // pred_check
      _
    $region3: #{dqn_forward.1} parent=1 // pred_check_branch
      %16 = sbr.rel (0) target = $region5
    $region4: #{dqn_forward.1} parent=1 // pred_region
      _
    $region5: #{dqn_forward.1} parent=1 // pred_fallthru
      _
    // Predicated region
    $region6: #{dqn_forward.1} parent=1 // pred_check
      _
    $region7: #{dqn_forward.1} parent=1 // pred_check_branch
      %18 = sbr.rel (0) target = $region9
    $region8: #{dqn_forward.1} parent=1 // pred_region
      _
    $region9: #{dqn_forward.1} parent=1 // pred_fallthru
      _
    // Predicated region
    $region10: #{dqn_forward.1} parent=1 // pred_check
      _
    $region11: #{dqn_forward.1} parent=1 // pred_check_branch
      %20 = sbr.rel (0) target = $region13
    $region12: #{dqn_forward.1} parent=1 // pred_region
      _
    $region13: #{dqn_forward.1} parent=1 // pred_fallthru
      _
    // Predicated region
    $region14: #{dqn_forward.1} parent=1 // pred_check
      _
    $region15: #{dqn_forward.1} parent=1 // pred_check_branch
      %22 = sbr.rel (0) target = $region17
    $region16: #{dqn_forward.1} parent=1 // pred_region
      _
    $region17: #{dqn_forward.1} parent=1 // pred_fallthru
      _
    // Predicated region
    $region18: #{dqn_forward.1} parent=1 // pred_check
      _
    $region19: #{dqn_forward.1} parent=1 // pred_check_branch
      %24 = sbr.rel (0) target = $region21
    $region20: #{dqn_forward.1} parent=1 // pred_region
      _
    $region21: #{dqn_forward.1} parent=1 // pred_fallthru
      _
    // Predicated region
    $region22: #{dqn_forward.1} parent=1 // pred_check
      _
    $region23: #{dqn_forward.1} parent=1 // pred_check_branch
      %26 = sbr.rel (0) target = $region25
    $region24: #{dqn_forward.1} parent=1 // pred_region
      _
    $region25: #{dqn_forward.1} parent=1 // pred_fallthru
      _
    // Predicated region
    $region26: #{dqn_forward.1} parent=1 // pred_check
      _
    $region27: #{dqn_forward.1} parent=1 // pred_check_branch
      %28 = sbr.rel (0) target = $region29
    $region28: #{dqn_forward.1} parent=1 // pred_region
      _
    $region29: #{dqn_forward.1} parent=1 // pred_fallthru
      _
    // Predicated region
    $region30: #{dqn_forward.1} parent=1 // pred_check
      _
    $region31: #{dqn_forward.1} parent=1 // pred_check_branch
      %30 = sbr.rel (0) target = $region33
    $region32: #{dqn_forward.1} parent=1 // pred_region
      _
    $region33: #{dqn_forward.1} parent=1 // pred_fallthru
      _
    // Predicated region
    $region34: #{dqn_forward.1} parent=1 // pred_check
      _
    $region35: #{dqn_forward.1} parent=1 // pred_check_branch
      %32 = sbr.rel (0) target = $region37
    $region36: #{dqn_forward.1} parent=1 // pred_region
      _
    $region37: #{dqn_forward.1} parent=1 // pred_fallthru
      _
    %v33 = vld [vmem:[%s0] sm:$0x3]
    %v34 = vld [vmem:[%s1] sm:$0xff]
    %v35 = vld [vmem:[%s2] sm:$0x1]
    %v37 = vlaneseq
    %v38 = vshrl.u32 %v37, 7
    %v39 = vsub.s32 0, %v38
    %v40 = vrot.slane %v35, %v39
    %vm42 = vcmask 64512
    %v44 = vsel %vm42, %v33, 0
    %46 = vmatprep.subr.mxu0 0.0
    %v47 = vand.u32 %v34, 4294901760
    %48 = vmatpush1.msra.mxu0 %v47
    %49 = vmatprep.subr.mxu0 0.0
    %50 = vmatpush1.msra.mxu0 0.0
    %51 = vmatprep.subr.mxu0 0.0
    %52 = vmatpush1.msra.mxu0 0.0
    %53 = vmatprep.subr.mxu0 0.0
    %54 = vmatpush1.msra.mxu0 0.0
    %55 = vmatprep.subr.mxu0 0.0
    %56 = vmatpush1.msra.mxu0 0.0
    %57 = vmatprep.subr.mxu0 0.0
    %58 = vmatpush1.msra.mxu0 0.0
    %59 = vmatprep.subr.mxu0 0.0
    %60 = vmatpush1.msra.mxu0 0.0
    %61 = vmatprep.subr.mxu0 0.0
    %62 = vmatpush1.msra.mxu0 0.0
    %63 = vmatprep.subr.mxu0 0.0
    %64 = vmatpush1.msra.mxu0 0.0
    %65 = vmatprep.subr.mxu0 0.0
    %66 = vmatpush1.msra.mxu0 0.0
    %67 = vmatprep.subr.mxu0 0.0
    %68 = vmatpush1.msra.mxu0 0.0
    %69 = vmatprep.subr.mxu0 0.0
    %70 = vmatpush1.msra.mxu0 0.0
    %71 = vmatprep.subr.mxu0 0.0
    %72 = vmatpush1.msra.mxu0 0.0
    %73 = vmatprep.subr.mxu0 0.0
    %74 = vmatpush1.msra.mxu0 0.0
    %75 = vmatprep.subr.mxu0 0.0
    %76 = vmatpush1.msra.mxu0 0.0
    %77 = vmatprep.subr.mxu0 0.0
    %78 = vmatpush1.msra.mxu0 0.0
    %79 = vmatprep.subr.mxu0 0.0
    %80 = vmatpush1.msra.mxu0 0.0
    %81 = vmatprep.subr.mxu0 0.0
    %82 = vmatpush1.msra.mxu0 0.0
    %83 = vmatprep.subr.mxu0 0.0
    %84 = vmatpush1.msra.mxu0 0.0
    %85 = vmatprep.subr.mxu0 0.0
    %86 = vmatpush1.msra.mxu0 0.0
    %87 = vmatprep.subr.mxu0 0.0
    %88 = vmatpush1.msra.mxu0 0.0
    %89 = vmatprep.subr.mxu0 0.0
    %90 = vmatpush1.msra.mxu0 0.0
    %91 = vmatprep.subr.mxu0 0.0
    %92 = vmatpush1.msra.mxu0 0.0
    %93 = vmatprep.subr.mxu0 0.0
    %94 = vmatpush1.msra.mxu0 0.0
    %95 = vmatprep.subr.mxu0 0.0
    %96 = vmatpush1.msra.mxu0 0.0
    %97 = vmatprep.subr.mxu0 0.0
    %98 = vmatpush1.msra.mxu0 0.0
    %99 = vmatprep.subr.mxu0 0.0
    %100 = vmatpush1.msra.mxu0 0.0
    %101 = vmatprep.subr.mxu0 0.0
    %102 = vmatpush1.msra.mxu0 0.0
    %103 = vmatprep.subr.mxu0 0.0
    %104 = vmatpush1.msra.mxu0 0.0
    %105 = vmatprep.subr.mxu0 0.0
    %106 = vmatpush1.msra.mxu0 0.0
    %107 = vmatprep.subr.mxu0 0.0
    %108 = vmatpush1.msra.mxu0 0.0
    %109 = vmatprep.subr.mxu0 0.0
    %110 = vmatpush1.msra.mxu0 0.0
    %111 = vmatprep.mubr.f32.mxu0 0.0
    %v112 = vand.u32 %v44, 4294901760
    %v113 = vsub.f32 %v44, %v112
    %v114 = vand.u32 %v113, 4294901760
    %v115 = vsub.f32 %v113, %v114
    %v116 = vand.u32 %v115, 4294901760
    %117 = vmatmul.mubr.f32.gmra.mrb[0].mxu0 %v116
    %v118 = vpop.f32.mrb[0].mxu0
    %v119 = vadd.f32 %v40, %v118
    %v120 = vpop.f32.mrb[0].mxu0
    %121 = vdwg.mxu0
    %122 = vmatprep.subr.mxu0 0.0
    %v123 = vand.u32 %v34, 4294901760
    %v124 = vsub.f32 %v34, %v123
    %v125 = vand.u32 %v124, 4294901760
    %v126 = vsub.f32 %v124, %v125
    %v127 = vand.u32 %v126, 4294901760
    %128 = vmatpush1.msra.mxu0 %v127
    %129 = vmatprep.subr.mxu0 0.0
    %130 = vmatpush1.msra.mxu0 0.0
    %131 = vmatprep.subr.mxu0 0.0
    %132 = vmatpush1.msra.mxu0 0.0
    %133 = vmatprep.subr.mxu0 0.0
    %134 = vmatpush1.msra.mxu0 0.0
    %135 = vmatprep.subr.mxu0 0.0
    %136 = vmatpush1.msra.mxu0 0.0
    %137 = vmatprep.subr.mxu0 0.0
    %138 = vmatpush1.msra.mxu0 0.0
    %139 = vmatprep.subr.mxu0 0.0
    %140 = vmatpush1.msra.mxu0 0.0
    %141 = vmatprep.subr.mxu0 0.0
    %142 = vmatpush1.msra.mxu0 0.0
    %143 = vmatprep.subr.mxu0 0.0
    %144 = vmatpush1.msra.mxu0 0.0
    %145 = vmatprep.subr.mxu0 0.0
    %146 = vmatpush1.msra.mxu0 0.0
    %147 = vmatprep.subr.mxu0 0.0
    %148 = vmatpush1.msra.mxu0 0.0
    %149 = vmatprep.subr.mxu0 0.0
    %150 = vmatpush1.msra.mxu0 0.0
    %151 = vmatprep.subr.mxu0 0.0
    %152 = vmatpush1.msra.mxu0 0.0
    %153 = vmatprep.subr.mxu0 0.0
    %154 = vmatpush1.msra.mxu0 0.0
    %155 = vmatprep.subr.mxu0 0.0
    %156 = vmatpush1.msra.mxu0 0.0
    %157 = vmatprep.subr.mxu0 0.0
    %158 = vmatpush1.msra.mxu0 0.0
    %159 = vmatprep.subr.mxu0 0.0
    %160 = vmatpush1.msra.mxu0 0.0
    %161 = vmatprep.subr.mxu0 0.0
    %162 = vmatpush1.msra.mxu0 0.0
    %163 = vmatprep.subr.mxu0 0.0
    %164 = vmatpush1.msra.mxu0 0.0
    %165 = vmatprep.subr.mxu0 0.0
    %166 = vmatpush1.msra.mxu0 0.0
    %167 = vmatprep.subr.mxu0 0.0
    %168 = vmatpush1.msra.mxu0 0.0
    %169 = vmatprep.subr.mxu0 0.0
    %170 = vmatpush1.msra.mxu0 0.0
    %171 = vmatprep.subr.mxu0 0.0
    %172 = vmatpush1.msra.mxu0 0.0
    %173 = vmatprep.subr.mxu0 0.0
    %174 = vmatpush1.msra.mxu0 0.0
    %175 = vmatprep.subr.mxu0 0.0
    %176 = vmatpush1.msra.mxu0 0.0
    %177 = vmatprep.subr.mxu0 0.0
    %178 = vmatpush1.msra.mxu0 0.0
    %179 = vmatprep.subr.mxu0 0.0
    %180 = vmatpush1.msra.mxu0 0.0
    %181 = vmatprep.subr.mxu0 0.0
    %182 = vmatpush1.msra.mxu0 0.0
    %183 = vmatprep.subr.mxu0 0.0
    %184 = vmatpush1.msra.mxu0 0.0
    %185 = vmatprep.subr.mxu0 0.0
    %186 = vmatpush1.msra.mxu0 0.0
    %187 = vmatprep.subr.mxu0 0.0
    %188 = vmatpush1.msra.mxu0 0.0
    %189 = vmatprep.subr.mxu0 0.0
    %190 = vmatpush1.msra.mxu0 0.0
    %191 = vmatprep.mubr.f32.mxu0 0.0
    %v192 = vand.u32 %v44, 4294901760
    %193 = vmatmul.mubr.f32.gmra.mrb[0].mxu0 %v192
    %v194 = vpop.f32.mrb[0].mxu0
    %v195 = vadd.f32 %v119, %v194
    %v196 = vpop.f32.mrb[0].mxu0
    %197 = vdwg.mxu0
    %198 = vmatprep.subr.mxu0 0.0
    %v199 = vand.u32 %v34, 4294901760
    %v200 = vsub.f32 %v34, %v199
    %201 = vmatpush1.msra.mxu0 %v200
    %202 = vmatprep.subr.mxu0 0.0
    %203 = vmatpush1.msra.mxu0 0.0
    %204 = vmatprep.subr.mxu0 0.0
    %205 = vmatpush1.msra.mxu0 0.0
    %206 = vmatprep.subr.mxu0 0.0
    %207 = vmatpush1.msra.mxu0 0.0
    %208 = vmatprep.subr.mxu0 0.0
    %209 = vmatpush1.msra.mxu0 0.0
    %210 = vmatprep.subr.mxu0 0.0
    %211 = vmatpush1.msra.mxu0 0.0
    %212 = vmatprep.subr.mxu0 0.0
    %213 = vmatpush1.msra.mxu0 0.0
    %214 = vmatprep.subr.mxu0 0.0
    %215 = vmatpush1.msra.mxu0 0.0
    %216 = vmatprep.subr.mxu0 0.0
    %217 = vmatpush1.msra.mxu0 0.0
    %218 = vmatprep.subr.mxu0 0.0
    %219 = vmatpush1.msra.mxu0 0.0
    %220 = vmatprep.subr.mxu0 0.0
    %221 = vmatpush1.msra.mxu0 0.0
    %222 = vmatprep.subr.mxu0 0.0
    %223 = vmatpush1.msra.mxu0 0.0
    %224 = vmatprep.subr.mxu0 0.0
    %225 = vmatpush1.msra.mxu0 0.0
    %226 = vmatprep.subr.mxu0 0.0
    %227 = vmatpush1.msra.mxu0 0.0
    %228 = vmatprep.subr.mxu0 0.0
    %229 = vmatpush1.msra.mxu0 0.0
    %230 = vmatprep.subr.mxu0 0.0
    %231 = vmatpush1.msra.mxu0 0.0
    %232 = vmatprep.subr.mxu0 0.0
    %233 = vmatpush1.msra.mxu0 0.0
    %234 = vmatprep.subr.mxu0 0.0
    %235 = vmatpush1.msra.mxu0 0.0
    %236 = vmatprep.subr.mxu0 0.0
    %237 = vmatpush1.msra.mxu0 0.0
    %238 = vmatprep.subr.mxu0 0.0
    %239 = vmatpush1.msra.mxu0 0.0
    %240 = vmatprep.subr.mxu0 0.0
    %241 = vmatpush1.msra.mxu0 0.0
    %242 = vmatprep.subr.mxu0 0.0
    %243 = vmatpush1.msra.mxu0 0.0
    %244 = vmatprep.subr.mxu0 0.0
    %245 = vmatpush1.msra.mxu0 0.0
    %246 = vmatprep.subr.mxu0 0.0
    %247 = vmatpush1.msra.mxu0 0.0
    %248 = vmatprep.subr.mxu0 0.0
    %249 = vmatpush1.msra.mxu0 0.0
    %250 = vmatprep.subr.mxu0 0.0
    %251 = vmatpush1.msra.mxu0 0.0
    %252 = vmatprep.subr.mxu0 0.0
    %253 = vmatpush1.msra.mxu0 0.0
    %254 = vmatprep.subr.mxu0 0.0
    %255 = vmatpush1.msra.mxu0 0.0
    %256 = vmatprep.subr.mxu0 0.0
    %257 = vmatpush1.msra.mxu0 0.0
    %258 = vmatprep.subr.mxu0 0.0
    %259 = vmatpush1.msra.mxu0 0.0
    %260 = vmatprep.subr.mxu0 0.0
    %261 = vmatpush1.msra.mxu0 0.0
    %262 = vmatprep.subr.mxu0 0.0
    %263 = vmatpush1.msra.mxu0 0.0
    %264 = vmatprep.mubr.f32.mxu0 0.0
    %v265 = vand.u32 %v44, 4294901760
    %v266 = vsub.f32 %v44, %v265
    %267 = vmatmul.mubr.f32.gmra.mrb[0].mxu0 %v266
    %v268 = vpop.f32.mrb[0].mxu0
    %v269 = vadd.f32 %v195, %v268
    %v270 = vpop.f32.mrb[0].mxu0
    %271 = vdwg.mxu0
    %272 = vmatprep.subr.mxu0 0.0
    %v273 = vand.u32 %v34, 4294901760
    %274 = vmatpush1.msra.mxu0 %v273
    %275 = vmatprep.subr.mxu0 0.0
    %276 = vmatpush1.msra.mxu0 0.0
    %277 = vmatprep.subr.mxu0 0.0
    %278 = vmatpush1.msra.mxu0 0.0
    %279 = vmatprep.subr.mxu0 0.0
    %280 = vmatpush1.msra.mxu0 0.0
    %281 = vmatprep.subr.mxu0 0.0
    %282 = vmatpush1.msra.mxu0 0.0
    %283 = vmatprep.subr.mxu0 0.0
    %284 = vmatpush1.msra.mxu0 0.0
    %285 = vmatprep.subr.mxu0 0.0
    %286 = vmatpush1.msra.mxu0 0.0
    %287 = vmatprep.subr.mxu0 0.0
    %288 = vmatpush1.msra.mxu0 0.0
    %289 = vmatprep.subr.mxu0 0.0
    %290 = vmatpush1.msra.mxu0 0.0
    %291 = vmatprep.subr.mxu0 0.0
    %292 = vmatpush1.msra.mxu0 0.0
    %293 = vmatprep.subr.mxu0 0.0
    %294 = vmatpush1.msra.mxu0 0.0
    %295 = vmatprep.subr.mxu0 0.0
    %296 = vmatpush1.msra.mxu0 0.0
    %297 = vmatprep.subr.mxu0 0.0
    %298 = vmatpush1.msra.mxu0 0.0
    %299 = vmatprep.subr.mxu0 0.0
    %300 = vmatpush1.msra.mxu0 0.0
    %301 = vmatprep.subr.mxu0 0.0
    %302 = vmatpush1.msra.mxu0 0.0
    %303 = vmatprep.subr.mxu0 0.0
    %304 = vmatpush1.msra.mxu0 0.0
    %305 = vmatprep.subr.mxu0 0.0
    %306 = vmatpush1.msra.mxu0 0.0
    %307 = vmatprep.subr.mxu0 0.0
    %308 = vmatpush1.msra.mxu0 0.0
    %309 = vmatprep.subr.mxu0 0.0
    %310 = vmatpush1.msra.mxu0 0.0
    %311 = vmatprep.subr.mxu0 0.0
    %312 = vmatpush1.msra.mxu0 0.0
    %313 = vmatprep.subr.mxu0 0.0
    %314 = vmatpush1.msra.mxu0 0.0
    %315 = vmatprep.subr.mxu0 0.0
    %316 = vmatpush1.msra.mxu0 0.0
    %317 = vmatprep.subr.mxu0 0.0
    %318 = vmatpush1.msra.mxu0 0.0
    %319 = vmatprep.subr.mxu0 0.0
    %320 = vmatpush1.msra.mxu0 0.0
    %321 = vmatprep.subr.mxu0 0.0
    %322 = vmatpush1.msra.mxu0 0.0
    %323 = vmatprep.subr.mxu0 0.0
    %324 = vmatpush1.msra.mxu0 0.0
    %325 = vmatprep.subr.mxu0 0.0
    %326 = vmatpush1.msra.mxu0 0.0
    %327 = vmatprep.subr.mxu0 0.0
    %328 = vmatpush1.msra.mxu0 0.0
    %329 = vmatprep.subr.mxu0 0.0
    %330 = vmatpush1.msra.mxu0 0.0
    %331 = vmatprep.subr.mxu0 0.0
    %332 = vmatpush1.msra.mxu0 0.0
    %333 = vmatprep.subr.mxu0 0.0
    %334 = vmatpush1.msra.mxu0 0.0
    %335 = vmatprep.subr.mxu0 0.0
    %336 = vmatpush1.msra.mxu0 0.0
    %337 = vmatprep.mubr.f32.mxu0 0.0
    %v338 = vand.u32 %v44, 4294901760
    %v339 = vsub.f32 %v44, %v338
    %v340 = vand.u32 %v339, 4294901760
    %341 = vmatmul.mubr.f32.gmra.mrb[0].mxu0 %v340
    %v342 = vpop.f32.mrb[0].mxu0
    %v343 = vadd.f32 %v269, %v342
    %v344 = vpop.f32.mrb[0].mxu0
    %345 = vdwg.mxu0
    %346 = vmatprep.subr.mxu0 0.0
    %v347 = vand.u32 %v34, 4294901760
    %v348 = vsub.f32 %v34, %v347
    %v349 = vand.u32 %v348, 4294901760
    %350 = vmatpush1.msra.mxu0 %v349
    %351 = vmatprep.subr.mxu0 0.0
    %352 = vmatpush1.msra.mxu0 0.0
    %353 = vmatprep.subr.mxu0 0.0
    %354 = vmatpush1.msra.mxu0 0.0
    %355 = vmatprep.subr.mxu0 0.0
    %356 = vmatpush1.msra.mxu0 0.0
    %357 = vmatprep.subr.mxu0 0.0
    %358 = vmatpush1.msra.mxu0 0.0
    %359 = vmatprep.subr.mxu0 0.0
    %360 = vmatpush1.msra.mxu0 0.0
    %361 = vmatprep.subr.mxu0 0.0
    %362 = vmatpush1.msra.mxu0 0.0
    %363 = vmatprep.subr.mxu0 0.0
    %364 = vmatpush1.msra.mxu0 0.0
    %365 = vmatprep.subr.mxu0 0.0
    %366 = vmatpush1.msra.mxu0 0.0
    %367 = vmatprep.subr.mxu0 0.0
    %368 = vmatpush1.msra.mxu0 0.0
    %369 = vmatprep.subr.mxu0 0.0
    %370 = vmatpush1.msra.mxu0 0.0
    %371 = vmatprep.subr.mxu0 0.0
    %372 = vmatpush1.msra.mxu0 0.0
    %373 = vmatprep.subr.mxu0 0.0
    %374 = vmatpush1.msra.mxu0 0.0
    %375 = vmatprep.subr.mxu0 0.0
    %376 = vmatpush1.msra.mxu0 0.0
    %377 = vmatprep.subr.mxu0 0.0
    %378 = vmatpush1.msra.mxu0 0.0
    %379 = vmatprep.subr.mxu0 0.0
    %380 = vmatpush1.msra.mxu0 0.0
    %381 = vmatprep.subr.mxu0 0.0
    %382 = vmatpush1.msra.mxu0 0.0
    %383 = vmatprep.subr.mxu0 0.0
    %384 = vmatpush1.msra.mxu0 0.0
    %385 = vmatprep.subr.mxu0 0.0
    %386 = vmatpush1.msra.mxu0 0.0
    %387 = vmatprep.subr.mxu0 0.0
    %388 = vmatpush1.msra.mxu0 0.0
    %389 = vmatprep.subr.mxu0 0.0
    %390 = vmatpush1.msra.mxu0 0.0
    %391 = vmatprep.subr.mxu0 0.0
    %392 = vmatpush1.msra.mxu0 0.0
    %393 = vmatprep.subr.mxu0 0.0
    %394 = vmatpush1.msra.mxu0 0.0
    %395 = vmatprep.subr.mxu0 0.0
    %396 = vmatpush1.msra.mxu0 0.0
    %397 = vmatprep.subr.mxu0 0.0
    %398 = vmatpush1.msra.mxu0 0.0
    %399 = vmatprep.subr.mxu0 0.0
    %400 = vmatpush1.msra.mxu0 0.0
    %401 = vmatprep.subr.mxu0 0.0
    %402 = vmatpush1.msra.mxu0 0.0
    %403 = vmatprep.subr.mxu0 0.0
    %404 = vmatpush1.msra.mxu0 0.0
    %405 = vmatprep.subr.mxu0 0.0
    %406 = vmatpush1.msra.mxu0 0.0
    %407 = vmatprep.subr.mxu0 0.0
    %408 = vmatpush1.msra.mxu0 0.0
    %409 = vmatprep.subr.mxu0 0.0
    %410 = vmatpush1.msra.mxu0 0.0
    %411 = vmatprep.subr.mxu0 0.0
    %412 = vmatpush1.msra.mxu0 0.0
    %413 = vmatprep.mubr.f32.mxu0 0.0
    %v414 = vand.u32 %v44, 4294901760
    %415 = vmatmul.mubr.f32.gmra.mrb[0].mxu0 %v414
    %v416 = vpop.f32.mrb[0].mxu0
    %v417 = vadd.f32 %v343, %v416
    %v418 = vpop.f32.mrb[0].mxu0
    %419 = vdwg.mxu0
    %420 = vmatprep.subr.mxu0 0.0
    %v421 = vand.u32 %v34, 4294901760
    %422 = vmatpush1.msra.mxu0 %v421
    %423 = vmatprep.subr.mxu0 0.0
    %424 = vmatpush1.msra.mxu0 0.0
    %425 = vmatprep.subr.mxu0 0.0
    %426 = vmatpush1.msra.mxu0 0.0
    %427 = vmatprep.subr.mxu0 0.0
    %428 = vmatpush1.msra.mxu0 0.0
    %429 = vmatprep.subr.mxu0 0.0
    %430 = vmatpush1.msra.mxu0 0.0
    %431 = vmatprep.subr.mxu0 0.0
    %432 = vmatpush1.msra.mxu0 0.0
    %433 = vmatprep.subr.mxu0 0.0
    %434 = vmatpush1.msra.mxu0 0.0
    %435 = vmatprep.subr.mxu0 0.0
    %436 = vmatpush1.msra.mxu0 0.0
    %437 = vmatprep.subr.mxu0 0.0
    %438 = vmatpush1.msra.mxu0 0.0
    %439 = vmatprep.subr.mxu0 0.0
    %440 = vmatpush1.msra.mxu0 0.0
    %441 = vmatprep.subr.mxu0 0.0
    %442 = vmatpush1.msra.mxu0 0.0
    %443 = vmatprep.subr.mxu0 0.0
    %444 = vmatpush1.msra.mxu0 0.0
    %445 = vmatprep.subr.mxu0 0.0
    %446 = vmatpush1.msra.mxu0 0.0
    %447 = vmatprep.subr.mxu0 0.0
    %448 = vmatpush1.msra.mxu0 0.0
    %449 = vmatprep.subr.mxu0 0.0
    %450 = vmatpush1.msra.mxu0 0.0
    %451 = vmatprep.subr.mxu0 0.0
    %452 = vmatpush1.msra.mxu0 0.0
    %453 = vmatprep.subr.mxu0 0.0
    %454 = vmatpush1.msra.mxu0 0.0
    %455 = vmatprep.subr.mxu0 0.0
    %456 = vmatpush1.msra.mxu0 0.0
    %457 = vmatprep.subr.mxu0 0.0
    %458 = vmatpush1.msra.mxu0 0.0
    %459 = vmatprep.subr.mxu0 0.0
    %460 = vmatpush1.msra.mxu0 0.0
    %461 = vmatprep.subr.mxu0 0.0
    %462 = vmatpush1.msra.mxu0 0.0
    %463 = vmatprep.subr.mxu0 0.0
    %464 = vmatpush1.msra.mxu0 0.0
    %465 = vmatprep.subr.mxu0 0.0
    %466 = vmatpush1.msra.mxu0 0.0
    %467 = vmatprep.subr.mxu0 0.0
    %468 = vmatpush1.msra.mxu0 0.0
    %469 = vmatprep.subr.mxu0 0.0
    %470 = vmatpush1.msra.mxu0 0.0
    %471 = vmatprep.subr.mxu0 0.0
    %472 = vmatpush1.msra.mxu0 0.0
    %473 = vmatprep.subr.mxu0 0.0
    %474 = vmatpush1.msra.mxu0 0.0
    %475 = vmatprep.subr.mxu0 0.0
    %476 = vmatpush1.msra.mxu0 0.0
    %477 = vmatprep.subr.mxu0 0.0
    %478 = vmatpush1.msra.mxu0 0.0
    %479 = vmatprep.subr.mxu0 0.0
    %480 = vmatpush1.msra.mxu0 0.0
    %481 = vmatprep.subr.mxu0 0.0
    %482 = vmatpush1.msra.mxu0 0.0
    %483 = vmatprep.subr.mxu0 0.0
    %484 = vmatpush1.msra.mxu0 0.0
    %485 = vmatprep.mubr.f32.mxu0 0.0
    %v486 = vand.u32 %v44, 4294901760
    %487 = vmatmul.mubr.f32.gmra.mrb[0].mxu0 %v486
    %v488 = vpop.f32.mrb[0].mxu0
    %v489 = vadd.f32 %v417, %v488
    %v490 = vpop.f32.mrb[0].mxu0
    %491 = vdwg.mxu0
    %v492 = vmax.f32 %v489, 0.0
    %v493 = vld [vmem:[%s3] sm:$0xff]
    %v494 = vld [vmem:[%s3 + $0x8] sm:$0xff]
    %v495 = vld [vmem:[%s3 + $0x10] sm:$0xff]
    %v496 = vld [vmem:[%s3 + $0x18] sm:$0xff]
    %v497 = vld [vmem:[%s3 + $0x20] sm:$0xff]
    %v498 = vld [vmem:[%s3 + $0x28] sm:$0xff]
    %v499 = vld [vmem:[%s3 + $0x30] sm:$0xff]
    %v500 = vld [vmem:[%s3 + $0x38] sm:$0xff]
    %v501 = vld [vmem:[%s4] sm:$0x1]
    %v503 = vlaneseq
    %v504 = vshrl.u32 %v503, 7
    %v505 = vsub.s32 0, %v504
    %v506 = vrot.slane %v501, %v505
    %vm508 = vcmask 523264
    %v510 = vsel %vm508, %v492, 0
    %512 = vmatprep.subr.mxu0 0.0
    %v513 = vand.u32 %v493, 4294901760
    %514 = vmatpush1.msra.mxu0 %v513
    %515 = vmatprep.subr.mxu0 0.0
    %v516 = vand.u32 %v494, 4294901760
    %517 = vmatpush1.msra.mxu0 %v516
    %518 = vmatprep.subr.mxu0 0.0
    %v519 = vand.u32 %v495, 4294901760
    %520 = vmatpush1.msra.mxu0 %v519
    %521 = vmatprep.subr.mxu0 0.0
    %v522 = vand.u32 %v496, 4294901760
    %523 = vmatpush1.msra.mxu0 %v522
    %524 = vmatprep.subr.mxu0 0.0
    %v525 = vand.u32 %v497, 4294901760
    %526 = vmatpush1.msra.mxu0 %v525
    %527 = vmatprep.subr.mxu0 0.0
    %v528 = vand.u32 %v498, 4294901760
    %529 = vmatpush1.msra.mxu0 %v528
    %530 = vmatprep.subr.mxu0 0.0
    %v531 = vand.u32 %v499, 4294901760
    %532 = vmatpush1.msra.mxu0 %v531
    %533 = vmatprep.subr.mxu0 0.0
    %v534 = vand.u32 %v500, 4294901760
    %535 = vmatpush1.msra.mxu0 %v534
    %536 = vmatprep.subr.mxu0 0.0
    %537 = vmatpush1.msra.mxu0 0.0
    %538 = vmatprep.subr.mxu0 0.0
    %539 = vmatpush1.msra.mxu0 0.0
    %540 = vmatprep.subr.mxu0 0.0
    %541 = vmatpush1.msra.mxu0 0.0
    %542 = vmatprep.subr.mxu0 0.0
    %543 = vmatpush1.msra.mxu0 0.0
    %544 = vmatprep.subr.mxu0 0.0
    %545 = vmatpush1.msra.mxu0 0.0
    %546 = vmatprep.subr.mxu0 0.0
    %547 = vmatpush1.msra.mxu0 0.0
    %548 = vmatprep.subr.mxu0 0.0
    %549 = vmatpush1.msra.mxu0 0.0
    %550 = vmatprep.subr.mxu0 0.0
    %551 = vmatpush1.msra.mxu0 0.0
    %552 = vmatprep.subr.mxu0 0.0
    %553 = vmatpush1.msra.mxu0 0.0
    %554 = vmatprep.subr.mxu0 0.0
    %555 = vmatpush1.msra.mxu0 0.0
    %556 = vmatprep.subr.mxu0 0.0
    %557 = vmatpush1.msra.mxu0 0.0
    %558 = vmatprep.subr.mxu0 0.0
    %559 = vmatpush1.msra.mxu0 0.0
    %560 = vmatprep.subr.mxu0 0.0
    %561 = vmatpush1.msra.mxu0 0.0
    %562 = vmatprep.subr.mxu0 0.0
    %563 = vmatpush1.msra.mxu0 0.0
    %564 = vmatprep.subr.mxu0 0.0
    %565 = vmatpush1.msra.mxu0 0.0
    %566 = vmatprep.subr.mxu0 0.0
    %567 = vmatpush1.msra.mxu0 0.0
    %568 = vmatprep.subr.mxu0 0.0
    %569 = vmatpush1.msra.mxu0 0.0
    %570 = vmatprep.subr.mxu0 0.0
    %571 = vmatpush1.msra.mxu0 0.0
    %572 = vmatprep.subr.mxu0 0.0
    %573 = vmatpush1.msra.mxu0 0.0
    %574 = vmatprep.subr.mxu0 0.0
    %575 = vmatpush1.msra.mxu0 0.0
    %576 = vmatprep.subr.mxu0 0.0
    %577 = vmatpush1.msra.mxu0 0.0
    %578 = vmatprep.subr.mxu0 0.0
    %579 = vmatpush1.msra.mxu0 0.0
    %580 = vmatprep.subr.mxu0 0.0
    %581 = vmatpush1.msra.mxu0 0.0
    %582 = vmatprep.subr.mxu0 0.0
    %583 = vmatpush1.msra.mxu0 0.0
    %584 = vmatprep.mubr.f32.mxu0 0.0
    %v585 = vand.u32 %v510, 4294901760
    %v586 = vsub.f32 %v510, %v585
    %v587 = vand.u32 %v586, 4294901760
    %v588 = vsub.f32 %v586, %v587
    %v589 = vand.u32 %v588, 4294901760
    %590 = vmatmul.mubr.f32.gmra.mrb[0].mxu0 %v589
    %v591 = vpop.f32.mrb[0].mxu0
    %v592 = vadd.f32 %v506, %v591
    %v593 = vpop.f32.mrb[0].mxu0
    %594 = vdwg.mxu0
    %595 = vmatprep.subr.mxu0 0.0
    %v596 = vand.u32 %v493, 4294901760
    %v597 = vsub.f32 %v493, %v596
    %v598 = vand.u32 %v597, 4294901760
    %v599 = vsub.f32 %v597, %v598
    %v600 = vand.u32 %v599, 4294901760
    %601 = vmatpush1.msra.mxu0 %v600
    %602 = vmatprep.subr.mxu0 0.0
    %v603 = vand.u32 %v494, 4294901760
    %v604 = vsub.f32 %v494, %v603
    %v605 = vand.u32 %v604, 4294901760
    %v606 = vsub.f32 %v604, %v605
    %v607 = vand.u32 %v606, 4294901760
    %608 = vmatpush1.msra.mxu0 %v607
    %609 = vmatprep.subr.mxu0 0.0
    %v610 = vand.u32 %v495, 4294901760
    %v611 = vsub.f32 %v495, %v610
    %v612 = vand.u32 %v611, 4294901760
    %v613 = vsub.f32 %v611, %v612
    %v614 = vand.u32 %v613, 4294901760
    %615 = vmatpush1.msra.mxu0 %v614
    %616 = vmatprep.subr.mxu0 0.0
    %v617 = vand.u32 %v496, 4294901760
    %v618 = vsub.f32 %v496, %v617
    %v619 = vand.u32 %v618, 4294901760
    %v620 = vsub.f32 %v618, %v619
    %v621 = vand.u32 %v620, 4294901760
    %622 = vmatpush1.msra.mxu0 %v621
    %623 = vmatprep.subr.mxu0 0.0
    %v624 = vand.u32 %v497, 4294901760
    %v625 = vsub.f32 %v497, %v624
    %v626 = vand.u32 %v625, 4294901760
    %v627 = vsub.f32 %v625, %v626
    %v628 = vand.u32 %v627, 4294901760
    %629 = vmatpush1.msra.mxu0 %v628
    %630 = vmatprep.subr.mxu0 0.0
    %v631 = vand.u32 %v498, 4294901760
    %v632 = vsub.f32 %v498, %v631
    %v633 = vand.u32 %v632, 4294901760
    %v634 = vsub.f32 %v632, %v633
    %v635 = vand.u32 %v634, 4294901760
    %636 = vmatpush1.msra.mxu0 %v635
    %637 = vmatprep.subr.mxu0 0.0
    %v638 = vand.u32 %v499, 4294901760
    %v639 = vsub.f32 %v499, %v638
    %v640 = vand.u32 %v639, 4294901760
    %v641 = vsub.f32 %v639, %v640
    %v642 = vand.u32 %v641, 4294901760
    %643 = vmatpush1.msra.mxu0 %v642
    %644 = vmatprep.subr.mxu0 0.0
    %v645 = vand.u32 %v500, 4294901760
    %v646 = vsub.f32 %v500, %v645
    %v647 = vand.u32 %v646, 4294901760
    %v648 = vsub.f32 %v646, %v647
    %v649 = vand.u32 %v648, 4294901760
    %650 = vmatpush1.msra.mxu0 %v649
    %651 = vmatprep.subr.mxu0 0.0
    %652 = vmatpush1.msra.mxu0 0.0
    %653 = vmatprep.subr.mxu0 0.0
    %654 = vmatpush1.msra.mxu0 0.0
    %655 = vmatprep.subr.mxu0 0.0
    %656 = vmatpush1.msra.mxu0 0.0
    %657 = vmatprep.subr.mxu0 0.0
    %658 = vmatpush1.msra.mxu0 0.0
    %659 = vmatprep.subr.mxu0 0.0
    %660 = vmatpush1.msra.mxu0 0.0
    %661 = vmatprep.subr.mxu0 0.0
    %662 = vmatpush1.msra.mxu0 0.0
    %663 = vmatprep.subr.mxu0 0.0
    %664 = vmatpush1.msra.mxu0 0.0
    %665 = vmatprep.subr.mxu0 0.0
    %666 = vmatpush1.msra.mxu0 0.0
    %667 = vmatprep.subr.mxu0 0.0
    %668 = vmatpush1.msra.mxu0 0.0
    %669 = vmatprep.subr.mxu0 0.0
    %670 = vmatpush1.msra.mxu0 0.0
    %671 = vmatprep.subr.mxu0 0.0
    %672 = vmatpush1.msra.mxu0 0.0
    %673 = vmatprep.subr.mxu0 0.0
    %674 = vmatpush1.msra.mxu0 0.0
    %675 = vmatprep.subr.mxu0 0.0
    %676 = vmatpush1.msra.mxu0 0.0
    %677 = vmatprep.subr.mxu0 0.0
    %678 = vmatpush1.msra.mxu0 0.0
    %679 = vmatprep.subr.mxu0 0.0
    %680 = vmatpush1.msra.mxu0 0.0
    %681 = vmatprep.subr.mxu0 0.0
    %682 = vmatpush1.msra.mxu0 0.0
    %683 = vmatprep.subr.mxu0 0.0
    %684 = vmatpush1.msra.mxu0 0.0
    %685 = vmatprep.subr.mxu0 0.0
    %686 = vmatpush1.msra.mxu0 0.0
    %687 = vmatprep.subr.mxu0 0.0
    %688 = vmatpush1.msra.mxu0 0.0
    %689 = vmatprep.subr.mxu0 0.0
    %690 = vmatpush1.msra.mxu0 0.0
    %691 = vmatprep.subr.mxu0 0.0
    %692 = vmatpush1.msra.mxu0 0.0
    %693 = vmatprep.subr.mxu0 0.0
    %694 = vmatpush1.msra.mxu0 0.0
    %695 = vmatprep.subr.mxu0 0.0
    %696 = vmatpush1.msra.mxu0 0.0
    %697 = vmatprep.subr.mxu0 0.0
    %698 = vmatpush1.msra.mxu0 0.0
    %699 = vmatprep.mubr.f32.mxu0 0.0
    %v700 = vand.u32 %v510, 4294901760
    %701 = vmatmul.mubr.f32.gmra.mrb[0].mxu0 %v700
    %v702 = vpop.f32.mrb[0].mxu0
    %v703 = vadd.f32 %v592, %v702
    %v704 = vpop.f32.mrb[0].mxu0
    %705 = vdwg.mxu0
    %706 = vmatprep.subr.mxu0 0.0
    %v707 = vand.u32 %v493, 4294901760
    %v708 = vsub.f32 %v493, %v707
    %709 = vmatpush1.msra.mxu0 %v708
    %710 = vmatprep.subr.mxu0 0.0
    %v711 = vand.u32 %v494, 4294901760
    %v712 = vsub.f32 %v494, %v711
    %713 = vmatpush1.msra.mxu0 %v712
    %714 = vmatprep.subr.mxu0 0.0
    %v715 = vand.u32 %v495, 4294901760
    %v716 = vsub.f32 %v495, %v715
    %717 = vmatpush1.msra.mxu0 %v716
    %718 = vmatprep.subr.mxu0 0.0
    %v719 = vand.u32 %v496, 4294901760
    %v720 = vsub.f32 %v496, %v719
    %721 = vmatpush1.msra.mxu0 %v720
    %722 = vmatprep.subr.mxu0 0.0
    %v723 = vand.u32 %v497, 4294901760
    %v724 = vsub.f32 %v497, %v723
    %725 = vmatpush1.msra.mxu0 %v724
    %726 = vmatprep.subr.mxu0 0.0
    %v727 = vand.u32 %v498, 4294901760
    %v728 = vsub.f32 %v498, %v727
    %729 = vmatpush1.msra.mxu0 %v728
    %730 = vmatprep.subr.mxu0 0.0
    %v731 = vand.u32 %v499, 4294901760
    %v732 = vsub.f32 %v499, %v731
    %733 = vmatpush1.msra.mxu0 %v732
    %734 = vmatprep.subr.mxu0 0.0
    %v735 = vand.u32 %v500, 4294901760
    %v736 = vsub.f32 %v500, %v735
    %737 = vmatpush1.msra.mxu0 %v736
    %738 = vmatprep.subr.mxu0 0.0
    %739 = vmatpush1.msra.mxu0 0.0
    %740 = vmatprep.subr.mxu0 0.0
    %741 = vmatpush1.msra.mxu0 0.0
    %742 = vmatprep.subr.mxu0 0.0
    %743 = vmatpush1.msra.mxu0 0.0
    %744 = vmatprep.subr.mxu0 0.0
    %745 = vmatpush1.msra.mxu0 0.0
    %746 = vmatprep.subr.mxu0 0.0
    %747 = vmatpush1.msra.mxu0 0.0
    %748 = vmatprep.subr.mxu0 0.0
    %749 = vmatpush1.msra.mxu0 0.0
    %750 = vmatprep.subr.mxu0 0.0
    %751 = vmatpush1.msra.mxu0 0.0
    %752 = vmatprep.subr.mxu0 0.0
    %753 = vmatpush1.msra.mxu0 0.0
    %754 = vmatprep.subr.mxu0 0.0
    %755 = vmatpush1.msra.mxu0 0.0
    %756 = vmatprep.subr.mxu0 0.0
    %757 = vmatpush1.msra.mxu0 0.0
    %758 = vmatprep.subr.mxu0 0.0
    %759 = vmatpush1.msra.mxu0 0.0
    %760 = vmatprep.subr.mxu0 0.0
    %761 = vmatpush1.msra.mxu0 0.0
    %762 = vmatprep.subr.mxu0 0.0
    %763 = vmatpush1.msra.mxu0 0.0
    %764 = vmatprep.subr.mxu0 0.0
    %765 = vmatpush1.msra.mxu0 0.0
    %766 = vmatprep.subr.mxu0 0.0
    %767 = vmatpush1.msra.mxu0 0.0
    %768 = vmatprep.subr.mxu0 0.0
    %769 = vmatpush1.msra.mxu0 0.0
    %770 = vmatprep.subr.mxu0 0.0
    %771 = vmatpush1.msra.mxu0 0.0
    %772 = vmatprep.subr.mxu0 0.0
    %773 = vmatpush1.msra.mxu0 0.0
    %774 = vmatprep.subr.mxu0 0.0
    %775 = vmatpush1.msra.mxu0 0.0
    %776 = vmatprep.subr.mxu0 0.0
    %777 = vmatpush1.msra.mxu0 0.0
    %778 = vmatprep.subr.mxu0 0.0
    %779 = vmatpush1.msra.mxu0 0.0
    %780 = vmatprep.subr.mxu0 0.0
    %781 = vmatpush1.msra.mxu0 0.0
    %782 = vmatprep.subr.mxu0 0.0
    %783 = vmatpush1.msra.mxu0 0.0
    %784 = vmatprep.subr.mxu0 0.0
    %785 = vmatpush1.msra.mxu0 0.0
    %786 = vmatprep.mubr.f32.mxu0 0.0
    %v787 = vand.u32 %v510, 4294901760
    %v788 = vsub.f32 %v510, %v787
    %789 = vmatmul.mubr.f32.gmra.mrb[0].mxu0 %v788
    %v790 = vpop.f32.mrb[0].mxu0
    %v791 = vadd.f32 %v703, %v790
    %v792 = vpop.f32.mrb[0].mxu0
    %793 = vdwg.mxu0
    %794 = vmatprep.subr.mxu0 0.0
    %v795 = vand.u32 %v493, 4294901760
    %796 = vmatpush1.msra.mxu0 %v795
    %797 = vmatprep.subr.mxu0 0.0
    %v798 = vand.u32 %v494, 4294901760
    %799 = vmatpush1.msra.mxu0 %v798
    %800 = vmatprep.subr.mxu0 0.0
    %v801 = vand.u32 %v495, 4294901760
    %802 = vmatpush1.msra.mxu0 %v801
    %803 = vmatprep.subr.mxu0 0.0
    %v804 = vand.u32 %v496, 4294901760
    %805 = vmatpush1.msra.mxu0 %v804
    %806 = vmatprep.subr.mxu0 0.0
    %v807 = vand.u32 %v497, 4294901760
    %808 = vmatpush1.msra.mxu0 %v807
    %809 = vmatprep.subr.mxu0 0.0
    %v810 = vand.u32 %v498, 4294901760
    %811 = vmatpush1.msra.mxu0 %v810
    %812 = vmatprep.subr.mxu0 0.0
    %v813 = vand.u32 %v499, 4294901760
    %814 = vmatpush1.msra.mxu0 %v813
    %815 = vmatprep.subr.mxu0 0.0
    %v816 = vand.u32 %v500, 4294901760
    %817 = vmatpush1.msra.mxu0 %v816
    %818 = vmatprep.subr.mxu0 0.0
    %819 = vmatpush1.msra.mxu0 0.0
    %820 = vmatprep.subr.mxu0 0.0
    %821 = vmatpush1.msra.mxu0 0.0
    %822 = vmatprep.subr.mxu0 0.0
    %823 = vmatpush1.msra.mxu0 0.0
    %824 = vmatprep.subr.mxu0 0.0
    %825 = vmatpush1.msra.mxu0 0.0
    %826 = vmatprep.subr.mxu0 0.0
    %827 = vmatpush1.msra.mxu0 0.0
    %828 = vmatprep.subr.mxu0 0.0
    %829 = vmatpush1.msra.mxu0 0.0
    %830 = vmatprep.subr.mxu0 0.0
    %831 = vmatpush1.msra.mxu0 0.0
    %832 = vmatprep.subr.mxu0 0.0
    %833 = vmatpush1.msra.mxu0 0.0
    %834 = vmatprep.subr.mxu0 0.0
    %835 = vmatpush1.msra.mxu0 0.0
    %836 = vmatprep.subr.mxu0 0.0
    %837 = vmatpush1.msra.mxu0 0.0
    %838 = vmatprep.subr.mxu0 0.0
    %839 = vmatpush1.msra.mxu0 0.0
    %840 = vmatprep.subr.mxu0 0.0
    %841 = vmatpush1.msra.mxu0 0.0
    %842 = vmatprep.subr.mxu0 0.0
    %843 = vmatpush1.msra.mxu0 0.0
    %844 = vmatprep.subr.mxu0 0.0
    %845 = vmatpush1.msra.mxu0 0.0
    %846 = vmatprep.subr.mxu0 0.0
    %847 = vmatpush1.msra.mxu0 0.0
    %848 = vmatprep.subr.mxu0 0.0
    %849 = vmatpush1.msra.mxu0 0.0
    %850 = vmatprep.subr.mxu0 0.0
    %851 = vmatpush1.msra.mxu0 0.0
    %852 = vmatprep.subr.mxu0 0.0
    %853 = vmatpush1.msra.mxu0 0.0
    %854 = vmatprep.subr.mxu0 0.0
    %855 = vmatpush1.msra.mxu0 0.0
    %856 = vmatprep.subr.mxu0 0.0
    %857 = vmatpush1.msra.mxu0 0.0
    %858 = vmatprep.subr.mxu0 0.0
    %859 = vmatpush1.msra.mxu0 0.0
    %860 = vmatprep.subr.mxu0 0.0
    %861 = vmatpush1.msra.mxu0 0.0
    %862 = vmatprep.subr.mxu0 0.0
    %863 = vmatpush1.msra.mxu0 0.0
    %864 = vmatprep.subr.mxu0 0.0
    %865 = vmatpush1.msra.mxu0 0.0
    %866 = vmatprep.mubr.f32.mxu0 0.0
    %v867 = vand.u32 %v510, 4294901760
    %v868 = vsub.f32 %v510, %v867
    %v869 = vand.u32 %v868, 4294901760
    %870 = vmatmul.mubr.f32.gmra.mrb[0].mxu0 %v869
    %v871 = vpop.f32.mrb[0].mxu0
    %v872 = vadd.f32 %v791, %v871
    %v873 = vpop.f32.mrb[0].mxu0
    %874 = vdwg.mxu0
    %875 = vmatprep.subr.mxu0 0.0
    %v876 = vand.u32 %v493, 4294901760
    %v877 = vsub.f32 %v493, %v876
    %v878 = vand.u32 %v877, 4294901760
    %879 = vmatpush1.msra.mxu0 %v878
    %880 = vmatprep.subr.mxu0 0.0
    %v881 = vand.u32 %v494, 4294901760
    %v882 = vsub.f32 %v494, %v881
    %v883 = vand.u32 %v882, 4294901760
    %884 = vmatpush1.msra.mxu0 %v883
    %885 = vmatprep.subr.mxu0 0.0
    %v886 = vand.u32 %v495, 4294901760
    %v887 = vsub.f32 %v495, %v886
    %v888 = vand.u32 %v887, 4294901760
    %889 = vmatpush1.msra.mxu0 %v888
    %890 = vmatprep.subr.mxu0 0.0
    %v891 = vand.u32 %v496, 4294901760
    %v892 = vsub.f32 %v496, %v891
    %v893 = vand.u32 %v892, 4294901760
    %894 = vmatpush1.msra.mxu0 %v893
    %895 = vmatprep.subr.mxu0 0.0
    %v896 = vand.u32 %v497, 4294901760
    %v897 = vsub.f32 %v497, %v896
    %v898 = vand.u32 %v897, 4294901760
    %899 = vmatpush1.msra.mxu0 %v898
    %900 = vmatprep.subr.mxu0 0.0
    %v901 = vand.u32 %v498, 4294901760
    %v902 = vsub.f32 %v498, %v901
    %v903 = vand.u32 %v902, 4294901760
    %904 = vmatpush1.msra.mxu0 %v903
    %905 = vmatprep.subr.mxu0 0.0
    %v906 = vand.u32 %v499, 4294901760
    %v907 = vsub.f32 %v499, %v906
    %v908 = vand.u32 %v907, 4294901760
    %909 = vmatpush1.msra.mxu0 %v908
    %910 = vmatprep.subr.mxu0 0.0
    %v911 = vand.u32 %v500, 4294901760
    %v912 = vsub.f32 %v500, %v911
    %v913 = vand.u32 %v912, 4294901760
    %914 = vmatpush1.msra.mxu0 %v913
    %915 = vmatprep.subr.mxu0 0.0
    %916 = vmatpush1.msra.mxu0 0.0
    %917 = vmatprep.subr.mxu0 0.0
    %918 = vmatpush1.msra.mxu0 0.0
    %919 = vmatprep.subr.mxu0 0.0
    %920 = vmatpush1.msra.mxu0 0.0
    %921 = vmatprep.subr.mxu0 0.0
    %922 = vmatpush1.msra.mxu0 0.0
    %923 = vmatprep.subr.mxu0 0.0
    %924 = vmatpush1.msra.mxu0 0.0
    %925 = vmatprep.subr.mxu0 0.0
    %926 = vmatpush1.msra.mxu0 0.0
    %927 = vmatprep.subr.mxu0 0.0
    %928 = vmatpush1.msra.mxu0 0.0
    %929 = vmatprep.subr.mxu0 0.0
    %930 = vmatpush1.msra.mxu0 0.0
    %931 = vmatprep.subr.mxu0 0.0
    %932 = vmatpush1.msra.mxu0 0.0
    %933 = vmatprep.subr.mxu0 0.0
    %934 = vmatpush1.msra.mxu0 0.0
    %935 = vmatprep.subr.mxu0 0.0
    %936 = vmatpush1.msra.mxu0 0.0
    %937 = vmatprep.subr.mxu0 0.0
    %938 = vmatpush1.msra.mxu0 0.0
    %939 = vmatprep.subr.mxu0 0.0
    %940 = vmatpush1.msra.mxu0 0.0
    %941 = vmatprep.subr.mxu0 0.0
    %942 = vmatpush1.msra.mxu0 0.0
    %943 = vmatprep.subr.mxu0 0.0
    %944 = vmatpush1.msra.mxu0 0.0
    %945 = vmatprep.subr.mxu0 0.0
    %946 = vmatpush1.msra.mxu0 0.0
    %947 = vmatprep.subr.mxu0 0.0
    %948 = vmatpush1.msra.mxu0 0.0
    %949 = vmatprep.subr.mxu0 0.0
    %950 = vmatpush1.msra.mxu0 0.0
    %951 = vmatprep.subr.mxu0 0.0
    %952 = vmatpush1.msra.mxu0 0.0
    %953 = vmatprep.subr.mxu0 0.0
    %954 = vmatpush1.msra.mxu0 0.0
    %955 = vmatprep.subr.mxu0 0.0
    %956 = vmatpush1.msra.mxu0 0.0
    %957 = vmatprep.subr.mxu0 0.0
    %958 = vmatpush1.msra.mxu0 0.0
    %959 = vmatprep.subr.mxu0 0.0
    %960 = vmatpush1.msra.mxu0 0.0
    %961 = vmatprep.subr.mxu0 0.0
    %962 = vmatpush1.msra.mxu0 0.0
    %963 = vmatprep.mubr.f32.mxu0 0.0
    %v964 = vand.u32 %v510, 4294901760
    %965 = vmatmul.mubr.f32.gmra.mrb[0].mxu0 %v964
    %v966 = vpop.f32.mrb[0].mxu0
    %v967 = vadd.f32 %v872, %v966
    %v968 = vpop.f32.mrb[0].mxu0
    %969 = vdwg.mxu0
    %970 = vmatprep.subr.mxu0 0.0
    %v971 = vand.u32 %v493, 4294901760
    %972 = vmatpush1.msra.mxu0 %v971
    %973 = vmatprep.subr.mxu0 0.0
    %v974 = vand.u32 %v494, 4294901760
    %975 = vmatpush1.msra.mxu0 %v974
    %976 = vmatprep.subr.mxu0 0.0
    %v977 = vand.u32 %v495, 4294901760
    %978 = vmatpush1.msra.mxu0 %v977
    %979 = vmatprep.subr.mxu0 0.0
    %v980 = vand.u32 %v496, 4294901760
    %981 = vmatpush1.msra.mxu0 %v980
    %982 = vmatprep.subr.mxu0 0.0
    %v983 = vand.u32 %v497, 4294901760
    %984 = vmatpush1.msra.mxu0 %v983
    %985 = vmatprep.subr.mxu0 0.0
    %v986 = vand.u32 %v498, 4294901760
    %987 = vmatpush1.msra.mxu0 %v986
    %988 = vmatprep.subr.mxu0 0.0
    %v989 = vand.u32 %v499, 4294901760
    %990 = vmatpush1.msra.mxu0 %v989
    %991 = vmatprep.subr.mxu0 0.0
    %v992 = vand.u32 %v500, 4294901760
    %993 = vmatpush1.msra.mxu0 %v992
    %994 = vmatprep.subr.mxu0 0.0
    %995 = vmatpush1.msra.mxu0 0.0
    %996 = vmatprep.subr.mxu0 0.0
    %997 = vmatpush1.msra.mxu0 0.0
    %998 = vmatprep.subr.mxu0 0.0
    %999 = vmatpush1.msra.mxu0 0.0
    %1000 = vmatprep.subr.mxu0 0.0
    %1001 = vmatpush1.msra.mxu0 0.0
    %1002 = vmatprep.subr.mxu0 0.0
    %1003 = vmatpush1.msra.mxu0 0.0
    %1004 = vmatprep.subr.mxu0 0.0
    %1005 = vmatpush1.msra.mxu0 0.0
    %1006 = vmatprep.subr.mxu0 0.0
    %1007 = vmatpush1.msra.mxu0 0.0
    %1008 = vmatprep.subr.mxu0 0.0
    %1009 = vmatpush1.msra.mxu0 0.0
    %1010 = vmatprep.subr.mxu0 0.0
    %1011 = vmatpush1.msra.mxu0 0.0
    %1012 = vmatprep.subr.mxu0 0.0
    %1013 = vmatpush1.msra.mxu0 0.0
    %1014 = vmatprep.subr.mxu0 0.0
    %1015 = vmatpush1.msra.mxu0 0.0
    %1016 = vmatprep.subr.mxu0 0.0
    %1017 = vmatpush1.msra.mxu0 0.0
    %1018 = vmatprep.subr.mxu0 0.0
    %1019 = vmatpush1.msra.mxu0 0.0
    %1020 = vmatprep.subr.mxu0 0.0
    %1021 = vmatpush1.msra.mxu0 0.0
    %1022 = vmatprep.subr.mxu0 0.0
    %1023 = vmatpush1.msra.mxu0 0.0
    %1024 = vmatprep.subr.mxu0 0.0
    %1025 = vmatpush1.msra.mxu0 0.0
    %1026 = vmatprep.subr.mxu0 0.0
    %1027 = vmatpush1.msra.mxu0 0.0
    %1028 = vmatprep.subr.mxu0 0.0
    %1029 = vmatpush1.msra.mxu0 0.0
    %1030 = vmatprep.subr.mxu0 0.0
    %1031 = vmatpush1.msra.mxu0 0.0
    %1032 = vmatprep.subr.mxu0 0.0
    %1033 = vmatpush1.msra.mxu0 0.0
    %1034 = vmatprep.subr.mxu0 0.0
    %1035 = vmatpush1.msra.mxu0 0.0
    %1036 = vmatprep.subr.mxu0 0.0
    %1037 = vmatpush1.msra.mxu0 0.0
    %1038 = vmatprep.subr.mxu0 0.0
    %1039 = vmatpush1.msra.mxu0 0.0
    %1040 = vmatprep.subr.mxu0 0.0
    %1041 = vmatpush1.msra.mxu0 0.0
    %1042 = vmatprep.mubr.f32.mxu0 0.0
    %v1043 = vand.u32 %v510, 4294901760
    %1044 = vmatmul.mubr.f32.gmra.mrb[0].mxu0 %v1043
    %v1045 = vpop.f32.mrb[0].mxu0
    %v1046 = vadd.f32 %v967, %v1045
    %v1047 = vpop.f32.mrb[0].mxu0
    %1048 = vdwg.mxu0
    %v1049 = vmax.f32 %v1046, 0.0
    %v1050 = vld [vmem:[%s5] sm:$0xff]
    %v1051 = vld [vmem:[%s5 + $0x8] sm:$0xff]
    %v1052 = vld [vmem:[%s5 + $0x10] sm:$0xff]
    %v1053 = vld [vmem:[%s5 + $0x18] sm:$0xff]
    %v1054 = vld [vmem:[%s5 + $0x20] sm:$0xff]
    %v1055 = vld [vmem:[%s5 + $0x28] sm:$0xff]
    %v1056 = vld [vmem:[%s5 + $0x30] sm:$0xff]
    %v1057 = vld [vmem:[%s5 + $0x38] sm:$0xff]
    %v1058 = vld [vmem:[%s6] sm:$0x1]
    %v1060 = vlaneseq
    %v1061 = vshrl.u32 %v1060, 7
    %v1062 = vsub.s32 0, %v1061
    %v1063 = vrot.slane %v1058, %v1062
    %v1066 = vsel %vm508, %v1049, 0
    %1068 = vmatprep.subr.mxu0 0.0
    %v1069 = vand.u32 %v1050, 4294901760
    %1070 = vmatpush1.msra.mxu0 %v1069
    %1071 = vmatprep.subr.mxu0 0.0
    %v1072 = vand.u32 %v1051, 4294901760
    %1073 = vmatpush1.msra.mxu0 %v1072
    %1074 = vmatprep.subr.mxu0 0.0
    %v1075 = vand.u32 %v1052, 4294901760
    %1076 = vmatpush1.msra.mxu0 %v1075
    %1077 = vmatprep.subr.mxu0 0.0
    %v1078 = vand.u32 %v1053, 4294901760
    %1079 = vmatpush1.msra.mxu0 %v1078
    %1080 = vmatprep.subr.mxu0 0.0
    %v1081 = vand.u32 %v1054, 4294901760
    %1082 = vmatpush1.msra.mxu0 %v1081
    %1083 = vmatprep.subr.mxu0 0.0
    %v1084 = vand.u32 %v1055, 4294901760
    %1085 = vmatpush1.msra.mxu0 %v1084
    %1086 = vmatprep.subr.mxu0 0.0
    %v1087 = vand.u32 %v1056, 4294901760
    %1088 = vmatpush1.msra.mxu0 %v1087
    %1089 = vmatprep.subr.mxu0 0.0
    %v1090 = vand.u32 %v1057, 4294901760
    %1091 = vmatpush1.msra.mxu0 %v1090
    %1092 = vmatprep.subr.mxu0 0.0
    %1093 = vmatpush1.msra.mxu0 0.0
    %1094 = vmatprep.subr.mxu0 0.0
    %1095 = vmatpush1.msra.mxu0 0.0
    %1096 = vmatprep.subr.mxu0 0.0
    %1097 = vmatpush1.msra.mxu0 0.0
    %1098 = vmatprep.subr.mxu0 0.0
    %1099 = vmatpush1.msra.mxu0 0.0
    %1100 = vmatprep.subr.mxu0 0.0
    %1101 = vmatpush1.msra.mxu0 0.0
    %1102 = vmatprep.subr.mxu0 0.0
    %1103 = vmatpush1.msra.mxu0 0.0
    %1104 = vmatprep.subr.mxu0 0.0
    %1105 = vmatpush1.msra.mxu0 0.0
    %1106 = vmatprep.subr.mxu0 0.0
    %1107 = vmatpush1.msra.mxu0 0.0
    %1108 = vmatprep.subr.mxu0 0.0
    %1109 = vmatpush1.msra.mxu0 0.0
    %1110 = vmatprep.subr.mxu0 0.0
    %1111 = vmatpush1.msra.mxu0 0.0
    %1112 = vmatprep.subr.mxu0 0.0
    %1113 = vmatpush1.msra.mxu0 0.0
    %1114 = vmatprep.subr.mxu0 0.0
    %1115 = vmatpush1.msra.mxu0 0.0
    %1116 = vmatprep.subr.mxu0 0.0
    %1117 = vmatpush1.msra.mxu0 0.0
    %1118 = vmatprep.subr.mxu0 0.0
    %1119 = vmatpush1.msra.mxu0 0.0
    %1120 = vmatprep.subr.mxu0 0.0
    %1121 = vmatpush1.msra.mxu0 0.0
    %1122 = vmatprep.subr.mxu0 0.0
    %1123 = vmatpush1.msra.mxu0 0.0
    %1124 = vmatprep.subr.mxu0 0.0
    %1125 = vmatpush1.msra.mxu0 0.0
    %1126 = vmatprep.subr.mxu0 0.0
    %1127 = vmatpush1.msra.mxu0 0.0
    %1128 = vmatprep.subr.mxu0 0.0
    %1129 = vmatpush1.msra.mxu0 0.0
    %1130 = vmatprep.subr.mxu0 0.0
    %1131 = vmatpush1.msra.mxu0 0.0
    %1132 = vmatprep.subr.mxu0 0.0
    %1133 = vmatpush1.msra.mxu0 0.0
    %1134 = vmatprep.subr.mxu0 0.0
    %1135 = vmatpush1.msra.mxu0 0.0
    %1136 = vmatprep.subr.mxu0 0.0
    %1137 = vmatpush1.msra.mxu0 0.0
    %1138 = vmatprep.subr.mxu0 0.0
    %1139 = vmatpush1.msra.mxu0 0.0
    %1140 = vmatprep.mubr.f32.mxu0 0.0
    %v1141 = vand.u32 %v1066, 4294901760
    %v1142 = vsub.f32 %v1066, %v1141
    %v1143 = vand.u32 %v1142, 4294901760
    %v1144 = vsub.f32 %v1142, %v1143
    %v1145 = vand.u32 %v1144, 4294901760
    %1146 = vmatmul.mubr.f32.gmra.mrb[0].mxu0 %v1145
    %v1147 = vpop.f32.mrb[0].mxu0
    %v1148 = vadd.f32 %v1063, %v1147
    %v1149 = vpop.f32.mrb[0].mxu0
    %1150 = vdwg.mxu0
    %1151 = vmatprep.subr.mxu0 0.0
    %v1152 = vand.u32 %v1050, 4294901760
    %v1153 = vsub.f32 %v1050, %v1152
    %v1154 = vand.u32 %v1153, 4294901760
    %v1155 = vsub.f32 %v1153, %v1154
    %v1156 = vand.u32 %v1155, 4294901760
    %1157 = vmatpush1.msra.mxu0 %v1156
    %1158 = vmatprep.subr.mxu0 0.0
    %v1159 = vand.u32 %v1051, 4294901760
    %v1160 = vsub.f32 %v1051, %v1159
    %v1161 = vand.u32 %v1160, 4294901760
    %v1162 = vsub.f32 %v1160, %v1161
    %v1163 = vand.u32 %v1162, 4294901760
    %1164 = vmatpush1.msra.mxu0 %v1163
    %1165 = vmatprep.subr.mxu0 0.0
    %v1166 = vand.u32 %v1052, 4294901760
    %v1167 = vsub.f32 %v1052, %v1166
    %v1168 = vand.u32 %v1167, 4294901760
    %v1169 = vsub.f32 %v1167, %v1168
    %v1170 = vand.u32 %v1169, 4294901760
    %1171 = vmatpush1.msra.mxu0 %v1170
    %1172 = vmatprep.subr.mxu0 0.0
    %v1173 = vand.u32 %v1053, 4294901760
    %v1174 = vsub.f32 %v1053, %v1173
    %v1175 = vand.u32 %v1174, 4294901760
    %v1176 = vsub.f32 %v1174, %v1175
    %v1177 = vand.u32 %v1176, 4294901760
    %1178 = vmatpush1.msra.mxu0 %v1177
    %1179 = vmatprep.subr.mxu0 0.0
    %v1180 = vand.u32 %v1054, 4294901760
    %v1181 = vsub.f32 %v1054, %v1180
    %v1182 = vand.u32 %v1181, 4294901760
    %v1183 = vsub.f32 %v1181, %v1182
    %v1184 = vand.u32 %v1183, 4294901760
    %1185 = vmatpush1.msra.mxu0 %v1184
    %1186 = vmatprep.subr.mxu0 0.0
    %v1187 = vand.u32 %v1055, 4294901760
    %v1188 = vsub.f32 %v1055, %v1187
    %v1189 = vand.u32 %v1188, 4294901760
    %v1190 = vsub.f32 %v1188, %v1189
    %v1191 = vand.u32 %v1190, 4294901760
    %1192 = vmatpush1.msra.mxu0 %v1191
    %1193 = vmatprep.subr.mxu0 0.0
    %v1194 = vand.u32 %v1056, 4294901760
    %v1195 = vsub.f32 %v1056, %v1194
    %v1196 = vand.u32 %v1195, 4294901760
    %v1197 = vsub.f32 %v1195, %v1196
    %v1198 = vand.u32 %v1197, 4294901760
    %1199 = vmatpush1.msra.mxu0 %v1198
    %1200 = vmatprep.subr.mxu0 0.0
    %v1201 = vand.u32 %v1057, 4294901760
    %v1202 = vsub.f32 %v1057, %v1201
    %v1203 = vand.u32 %v1202, 4294901760
    %v1204 = vsub.f32 %v1202, %v1203
    %v1205 = vand.u32 %v1204, 4294901760
    %1206 = vmatpush1.msra.mxu0 %v1205
    %1207 = vmatprep.subr.mxu0 0.0
    %1208 = vmatpush1.msra.mxu0 0.0
    %1209 = vmatprep.subr.mxu0 0.0
    %1210 = vmatpush1.msra.mxu0 0.0
    %1211 = vmatprep.subr.mxu0 0.0
    %1212 = vmatpush1.msra.mxu0 0.0
    %1213 = vmatprep.subr.mxu0 0.0
    %1214 = vmatpush1.msra.mxu0 0.0
    %1215 = vmatprep.subr.mxu0 0.0
    %1216 = vmatpush1.msra.mxu0 0.0
    %1217 = vmatprep.subr.mxu0 0.0
    %1218 = vmatpush1.msra.mxu0 0.0
    %1219 = vmatprep.subr.mxu0 0.0
    %1220 = vmatpush1.msra.mxu0 0.0
    %1221 = vmatprep.subr.mxu0 0.0
    %1222 = vmatpush1.msra.mxu0 0.0
    %1223 = vmatprep.subr.mxu0 0.0
    %1224 = vmatpush1.msra.mxu0 0.0
    %1225 = vmatprep.subr.mxu0 0.0
    %1226 = vmatpush1.msra.mxu0 0.0
    %1227 = vmatprep.subr.mxu0 0.0
    %1228 = vmatpush1.msra.mxu0 0.0
    %1229 = vmatprep.subr.mxu0 0.0
    %1230 = vmatpush1.msra.mxu0 0.0
    %1231 = vmatprep.subr.mxu0 0.0
    %1232 = vmatpush1.msra.mxu0 0.0
    %1233 = vmatprep.subr.mxu0 0.0
    %1234 = vmatpush1.msra.mxu0 0.0
    %1235 = vmatprep.subr.mxu0 0.0
    %1236 = vmatpush1.msra.mxu0 0.0
    %1237 = vmatprep.subr.mxu0 0.0
    %1238 = vmatpush1.msra.mxu0 0.0
    %1239 = vmatprep.subr.mxu0 0.0
    %1240 = vmatpush1.msra.mxu0 0.0
    %1241 = vmatprep.subr.mxu0 0.0
    %1242 = vmatpush1.msra.mxu0 0.0
    %1243 = vmatprep.subr.mxu0 0.0
    %1244 = vmatpush1.msra.mxu0 0.0
    %1245 = vmatprep.subr.mxu0 0.0
    %1246 = vmatpush1.msra.mxu0 0.0
    %1247 = vmatprep.subr.mxu0 0.0
    %1248 = vmatpush1.msra.mxu0 0.0
    %1249 = vmatprep.subr.mxu0 0.0
    %1250 = vmatpush1.msra.mxu0 0.0
    %1251 = vmatprep.subr.mxu0 0.0
    %1252 = vmatpush1.msra.mxu0 0.0
    %1253 = vmatprep.subr.mxu0 0.0
    %1254 = vmatpush1.msra.mxu0 0.0
    %1255 = vmatprep.mubr.f32.mxu0 0.0
    %v1256 = vand.u32 %v1066, 4294901760
    %1257 = vmatmul.mubr.f32.gmra.mrb[0].mxu0 %v1256
    %v1258 = vpop.f32.mrb[0].mxu0
    %v1259 = vadd.f32 %v1148, %v1258
    %v1260 = vpop.f32.mrb[0].mxu0
    %1261 = vdwg.mxu0
    %1262 = vmatprep.subr.mxu0 0.0
    %v1263 = vand.u32 %v1050, 4294901760
    %v1264 = vsub.f32 %v1050, %v1263
    %1265 = vmatpush1.msra.mxu0 %v1264
    %1266 = vmatprep.subr.mxu0 0.0
    %v1267 = vand.u32 %v1051, 4294901760
    %v1268 = vsub.f32 %v1051, %v1267
    %1269 = vmatpush1.msra.mxu0 %v1268
    %1270 = vmatprep.subr.mxu0 0.0
    %v1271 = vand.u32 %v1052, 4294901760
    %v1272 = vsub.f32 %v1052, %v1271
    %1273 = vmatpush1.msra.mxu0 %v1272
    %1274 = vmatprep.subr.mxu0 0.0
    %v1275 = vand.u32 %v1053, 4294901760
    %v1276 = vsub.f32 %v1053, %v1275
    %1277 = vmatpush1.msra.mxu0 %v1276
    %1278 = vmatprep.subr.mxu0 0.0
    %v1279 = vand.u32 %v1054, 4294901760
    %v1280 = vsub.f32 %v1054, %v1279
    %1281 = vmatpush1.msra.mxu0 %v1280
    %1282 = vmatprep.subr.mxu0 0.0
    %v1283 = vand.u32 %v1055, 4294901760
    %v1284 = vsub.f32 %v1055, %v1283
    %1285 = vmatpush1.msra.mxu0 %v1284
    %1286 = vmatprep.subr.mxu0 0.0
    %v1287 = vand.u32 %v1056, 4294901760
    %v1288 = vsub.f32 %v1056, %v1287
    %1289 = vmatpush1.msra.mxu0 %v1288
    %1290 = vmatprep.subr.mxu0 0.0
    %v1291 = vand.u32 %v1057, 4294901760
    %v1292 = vsub.f32 %v1057, %v1291
    %1293 = vmatpush1.msra.mxu0 %v1292
    %1294 = vmatprep.subr.mxu0 0.0
    %1295 = vmatpush1.msra.mxu0 0.0
    %1296 = vmatprep.subr.mxu0 0.0
    %1297 = vmatpush1.msra.mxu0 0.0
    %1298 = vmatprep.subr.mxu0 0.0
    %1299 = vmatpush1.msra.mxu0 0.0
    %1300 = vmatprep.subr.mxu0 0.0
    %1301 = vmatpush1.msra.mxu0 0.0
    %1302 = vmatprep.subr.mxu0 0.0
    %1303 = vmatpush1.msra.mxu0 0.0
    %1304 = vmatprep.subr.mxu0 0.0
    %1305 = vmatpush1.msra.mxu0 0.0
    %1306 = vmatprep.subr.mxu0 0.0
    %1307 = vmatpush1.msra.mxu0 0.0
    %1308 = vmatprep.subr.mxu0 0.0
    %1309 = vmatpush1.msra.mxu0 0.0
    %1310 = vmatprep.subr.mxu0 0.0
    %1311 = vmatpush1.msra.mxu0 0.0
    %1312 = vmatprep.subr.mxu0 0.0
    %1313 = vmatpush1.msra.mxu0 0.0
    %1314 = vmatprep.subr.mxu0 0.0
    %1315 = vmatpush1.msra.mxu0 0.0
    %1316 = vmatprep.subr.mxu0 0.0
    %1317 = vmatpush1.msra.mxu0 0.0
    %1318 = vmatprep.subr.mxu0 0.0
    %1319 = vmatpush1.msra.mxu0 0.0
    %1320 = vmatprep.subr.mxu0 0.0
    %1321 = vmatpush1.msra.mxu0 0.0
    %1322 = vmatprep.subr.mxu0 0.0
    %1323 = vmatpush1.msra.mxu0 0.0
    %1324 = vmatprep.subr.mxu0 0.0
    %1325 = vmatpush1.msra.mxu0 0.0
    %1326 = vmatprep.subr.mxu0 0.0
    %1327 = vmatpush1.msra.mxu0 0.0
    %1328 = vmatprep.subr.mxu0 0.0
    %1329 = vmatpush1.msra.mxu0 0.0
    %1330 = vmatprep.subr.mxu0 0.0
    %1331 = vmatpush1.msra.mxu0 0.0
    %1332 = vmatprep.subr.mxu0 0.0
    %1333 = vmatpush1.msra.mxu0 0.0
    %1334 = vmatprep.subr.mxu0 0.0
    %1335 = vmatpush1.msra.mxu0 0.0
    %1336 = vmatprep.subr.mxu0 0.0
    %1337 = vmatpush1.msra.mxu0 0.0
    %1338 = vmatprep.subr.mxu0 0.0
    %1339 = vmatpush1.msra.mxu0 0.0
    %1340 = vmatprep.subr.mxu0 0.0
    %1341 = vmatpush1.msra.mxu0 0.0
    %1342 = vmatprep.mubr.f32.mxu0 0.0
    %v1343 = vand.u32 %v1066, 4294901760
    %v1344 = vsub.f32 %v1066, %v1343
    %1345 = vmatmul.mubr.f32.gmra.mrb[0].mxu0 %v1344
    %v1346 = vpop.f32.mrb[0].mxu0
    %v1347 = vadd.f32 %v1259, %v1346
    %v1348 = vpop.f32.mrb[0].mxu0
    %1349 = vdwg.mxu0
    %1350 = vmatprep.subr.mxu0 0.0
    %v1351 = vand.u32 %v1050, 4294901760
    %1352 = vmatpush1.msra.mxu0 %v1351
    %1353 = vmatprep.subr.mxu0 0.0
    %v1354 = vand.u32 %v1051, 4294901760
    %1355 = vmatpush1.msra.mxu0 %v1354
    %1356 = vmatprep.subr.mxu0 0.0
    %v1357 = vand.u32 %v1052, 4294901760
    %1358 = vmatpush1.msra.mxu0 %v1357
    %1359 = vmatprep.subr.mxu0 0.0
    %v1360 = vand.u32 %v1053, 4294901760
    %1361 = vmatpush1.msra.mxu0 %v1360
    %1362 = vmatprep.subr.mxu0 0.0
    %v1363 = vand.u32 %v1054, 4294901760
    %1364 = vmatpush1.msra.mxu0 %v1363
    %1365 = vmatprep.subr.mxu0 0.0
    %v1366 = vand.u32 %v1055, 4294901760
    %1367 = vmatpush1.msra.mxu0 %v1366
    %1368 = vmatprep.subr.mxu0 0.0
    %v1369 = vand.u32 %v1056, 4294901760
    %1370 = vmatpush1.msra.mxu0 %v1369
    %1371 = vmatprep.subr.mxu0 0.0
    %v1372 = vand.u32 %v1057, 4294901760
    %1373 = vmatpush1.msra.mxu0 %v1372
    %1374 = vmatprep.subr.mxu0 0.0
    %1375 = vmatpush1.msra.mxu0 0.0
    %1376 = vmatprep.subr.mxu0 0.0
    %1377 = vmatpush1.msra.mxu0 0.0
    %1378 = vmatprep.subr.mxu0 0.0
    %1379 = vmatpush1.msra.mxu0 0.0
    %1380 = vmatprep.subr.mxu0 0.0
    %1381 = vmatpush1.msra.mxu0 0.0
    %1382 = vmatprep.subr.mxu0 0.0
    %1383 = vmatpush1.msra.mxu0 0.0
    %1384 = vmatprep.subr.mxu0 0.0
    %1385 = vmatpush1.msra.mxu0 0.0
    %1386 = vmatprep.subr.mxu0 0.0
    %1387 = vmatpush1.msra.mxu0 0.0
    %1388 = vmatprep.subr.mxu0 0.0
    %1389 = vmatpush1.msra.mxu0 0.0
    %1390 = vmatprep.subr.mxu0 0.0
    %1391 = vmatpush1.msra.mxu0 0.0
    %1392 = vmatprep.subr.mxu0 0.0
    %1393 = vmatpush1.msra.mxu0 0.0
    %1394 = vmatprep.subr.mxu0 0.0
    %1395 = vmatpush1.msra.mxu0 0.0
    %1396 = vmatprep.subr.mxu0 0.0
    %1397 = vmatpush1.msra.mxu0 0.0
    %1398 = vmatprep.subr.mxu0 0.0
    %1399 = vmatpush1.msra.mxu0 0.0
    %1400 = vmatprep.subr.mxu0 0.0
    %1401 = vmatpush1.msra.mxu0 0.0
    %1402 = vmatprep.subr.mxu0 0.0
    %1403 = vmatpush1.msra.mxu0 0.0
    %1404 = vmatprep.subr.mxu0 0.0
    %1405 = vmatpush1.msra.mxu0 0.0
    %1406 = vmatprep.subr.mxu0 0.0
    %1407 = vmatpush1.msra.mxu0 0.0
    %1408 = vmatprep.subr.mxu0 0.0
    %1409 = vmatpush1.msra.mxu0 0.0
    %1410 = vmatprep.subr.mxu0 0.0
    %1411 = vmatpush1.msra.mxu0 0.0
    %1412 = vmatprep.subr.mxu0 0.0
    %1413 = vmatpush1.msra.mxu0 0.0
    %1414 = vmatprep.subr.mxu0 0.0
    %1415 = vmatpush1.msra.mxu0 0.0
    %1416 = vmatprep.subr.mxu0 0.0
    %1417 = vmatpush1.msra.mxu0 0.0
    %1418 = vmatprep.subr.mxu0 0.0
    %1419 = vmatpush1.msra.mxu0 0.0
    %1420 = vmatprep.subr.mxu0 0.0
    %1421 = vmatpush1.msra.mxu0 0.0
    %1422 = vmatprep.mubr.f32.mxu0 0.0
    %v1423 = vand.u32 %v1066, 4294901760
    %v1424 = vsub.f32 %v1066, %v1423
    %v1425 = vand.u32 %v1424, 4294901760
    %1426 = vmatmul.mubr.f32.gmra.mrb[0].mxu0 %v1425
    %v1427 = vpop.f32.mrb[0].mxu0
    %v1428 = vadd.f32 %v1347, %v1427
    %v1429 = vpop.f32.mrb[0].mxu0
    %1430 = vdwg.mxu0
    %1431 = vmatprep.subr.mxu0 0.0
    %v1432 = vand.u32 %v1050, 4294901760
    %v1433 = vsub.f32 %v1050, %v1432
    %v1434 = vand.u32 %v1433, 4294901760
    %1435 = vmatpush1.msra.mxu0 %v1434
    %1436 = vmatprep.subr.mxu0 0.0
    %v1437 = vand.u32 %v1051, 4294901760
    %v1438 = vsub.f32 %v1051, %v1437
    %v1439 = vand.u32 %v1438, 4294901760
    %1440 = vmatpush1.msra.mxu0 %v1439
    %1441 = vmatprep.subr.mxu0 0.0
    %v1442 = vand.u32 %v1052, 4294901760
    %v1443 = vsub.f32 %v1052, %v1442
    %v1444 = vand.u32 %v1443, 4294901760
    %1445 = vmatpush1.msra.mxu0 %v1444
    %1446 = vmatprep.subr.mxu0 0.0
    %v1447 = vand.u32 %v1053, 4294901760
    %v1448 = vsub.f32 %v1053, %v1447
    %v1449 = vand.u32 %v1448, 4294901760
    %1450 = vmatpush1.msra.mxu0 %v1449
    %1451 = vmatprep.subr.mxu0 0.0
    %v1452 = vand.u32 %v1054, 4294901760
    %v1453 = vsub.f32 %v1054, %v1452
    %v1454 = vand.u32 %v1453, 4294901760
    %1455 = vmatpush1.msra.mxu0 %v1454
    %1456 = vmatprep.subr.mxu0 0.0
    %v1457 = vand.u32 %v1055, 4294901760
    %v1458 = vsub.f32 %v1055, %v1457
    %v1459 = vand.u32 %v1458, 4294901760
    %1460 = vmatpush1.msra.mxu0 %v1459
    %1461 = vmatprep.subr.mxu0 0.0
    %v1462 = vand.u32 %v1056, 4294901760
    %v1463 = vsub.f32 %v1056, %v1462
    %v1464 = vand.u32 %v1463, 4294901760
    %1465 = vmatpush1.msra.mxu0 %v1464
    %1466 = vmatprep.subr.mxu0 0.0
    %v1467 = vand.u32 %v1057, 4294901760
    %v1468 = vsub.f32 %v1057, %v1467
    %v1469 = vand.u32 %v1468, 4294901760
    %1470 = vmatpush1.msra.mxu0 %v1469
    %1471 = vmatprep.subr.mxu0 0.0
    %1472 = vmatpush1.msra.mxu0 0.0
    %1473 = vmatprep.subr.mxu0 0.0
    %1474 = vmatpush1.msra.mxu0 0.0
    %1475 = vmatprep.subr.mxu0 0.0
    %1476 = vmatpush1.msra.mxu0 0.0
    %1477 = vmatprep.subr.mxu0 0.0
    %1478 = vmatpush1.msra.mxu0 0.0
    %1479 = vmatprep.subr.mxu0 0.0
    %1480 = vmatpush1.msra.mxu0 0.0
    %1481 = vmatprep.subr.mxu0 0.0
    %1482 = vmatpush1.msra.mxu0 0.0
    %1483 = vmatprep.subr.mxu0 0.0
    %1484 = vmatpush1.msra.mxu0 0.0
    %1485 = vmatprep.subr.mxu0 0.0
    %1486 = vmatpush1.msra.mxu0 0.0
    %1487 = vmatprep.subr.mxu0 0.0
    %1488 = vmatpush1.msra.mxu0 0.0
    %1489 = vmatprep.subr.mxu0 0.0
    %1490 = vmatpush1.msra.mxu0 0.0
    %1491 = vmatprep.subr.mxu0 0.0
    %1492 = vmatpush1.msra.mxu0 0.0
    %1493 = vmatprep.subr.mxu0 0.0
    %1494 = vmatpush1.msra.mxu0 0.0
    %1495 = vmatprep.subr.mxu0 0.0
    %1496 = vmatpush1.msra.mxu0 0.0
    %1497 = vmatprep.subr.mxu0 0.0
    %1498 = vmatpush1.msra.mxu0 0.0
    %1499 = vmatprep.subr.mxu0 0.0
    %1500 = vmatpush1.msra.mxu0 0.0
    %1501 = vmatprep.subr.mxu0 0.0
    %1502 = vmatpush1.msra.mxu0 0.0
    %1503 = vmatprep.subr.mxu0 0.0
    %1504 = vmatpush1.msra.mxu0 0.0
    %1505 = vmatprep.subr.mxu0 0.0
    %1506 = vmatpush1.msra.mxu0 0.0
    %1507 = vmatprep.subr.mxu0 0.0
    %1508 = vmatpush1.msra.mxu0 0.0
    %1509 = vmatprep.subr.mxu0 0.0
    %1510 = vmatpush1.msra.mxu0 0.0
    %1511 = vmatprep.subr.mxu0 0.0
    %1512 = vmatpush1.msra.mxu0 0.0
    %1513 = vmatprep.subr.mxu0 0.0
    %1514 = vmatpush1.msra.mxu0 0.0
    %1515 = vmatprep.subr.mxu0 0.0
    %1516 = vmatpush1.msra.mxu0 0.0
    %1517 = vmatprep.subr.mxu0 0.0
    %1518 = vmatpush1.msra.mxu0 0.0
    %1519 = vmatprep.mubr.f32.mxu0 0.0
    %v1520 = vand.u32 %v1066, 4294901760
    %1521 = vmatmul.mubr.f32.gmra.mrb[0].mxu0 %v1520
    %v1522 = vpop.f32.mrb[0].mxu0
    %v1523 = vadd.f32 %v1428, %v1522
    %v1524 = vpop.f32.mrb[0].mxu0
    %1525 = vdwg.mxu0
    %1526 = vmatprep.subr.mxu0 0.0
    %v1527 = vand.u32 %v1050, 4294901760
    %1528 = vmatpush1.msra.mxu0 %v1527
    %1529 = vmatprep.subr.mxu0 0.0
    %v1530 = vand.u32 %v1051, 4294901760
    %1531 = vmatpush1.msra.mxu0 %v1530
    %1532 = vmatprep.subr.mxu0 0.0
    %v1533 = vand.u32 %v1052, 4294901760
    %1534 = vmatpush1.msra.mxu0 %v1533
    %1535 = vmatprep.subr.mxu0 0.0
    %v1536 = vand.u32 %v1053, 4294901760
    %1537 = vmatpush1.msra.mxu0 %v1536
    %1538 = vmatprep.subr.mxu0 0.0
    %v1539 = vand.u32 %v1054, 4294901760
    %1540 = vmatpush1.msra.mxu0 %v1539
    %1541 = vmatprep.subr.mxu0 0.0
    %v1542 = vand.u32 %v1055, 4294901760
    %1543 = vmatpush1.msra.mxu0 %v1542
    %1544 = vmatprep.subr.mxu0 0.0
    %v1545 = vand.u32 %v1056, 4294901760
    %1546 = vmatpush1.msra.mxu0 %v1545
    %1547 = vmatprep.subr.mxu0 0.0
    %v1548 = vand.u32 %v1057, 4294901760
    %1549 = vmatpush1.msra.mxu0 %v1548
    %1550 = vmatprep.subr.mxu0 0.0
    %1551 = vmatpush1.msra.mxu0 0.0
    %1552 = vmatprep.subr.mxu0 0.0
    %1553 = vmatpush1.msra.mxu0 0.0
    %1554 = vmatprep.subr.mxu0 0.0
    %1555 = vmatpush1.msra.mxu0 0.0
    %1556 = vmatprep.subr.mxu0 0.0
    %1557 = vmatpush1.msra.mxu0 0.0
    %1558 = vmatprep.subr.mxu0 0.0
    %1559 = vmatpush1.msra.mxu0 0.0
    %1560 = vmatprep.subr.mxu0 0.0
    %1561 = vmatpush1.msra.mxu0 0.0
    %1562 = vmatprep.subr.mxu0 0.0
    %1563 = vmatpush1.msra.mxu0 0.0
    %1564 = vmatprep.subr.mxu0 0.0
    %1565 = vmatpush1.msra.mxu0 0.0
    %1566 = vmatprep.subr.mxu0 0.0
    %1567 = vmatpush1.msra.mxu0 0.0
    %1568 = vmatprep.subr.mxu0 0.0
    %1569 = vmatpush1.msra.mxu0 0.0
    %1570 = vmatprep.subr.mxu0 0.0
    %1571 = vmatpush1.msra.mxu0 0.0
    %1572 = vmatprep.subr.mxu0 0.0
    %1573 = vmatpush1.msra.mxu0 0.0
    %1574 = vmatprep.subr.mxu0 0.0
    %1575 = vmatpush1.msra.mxu0 0.0
    %1576 = vmatprep.subr.mxu0 0.0
    %1577 = vmatpush1.msra.mxu0 0.0
    %1578 = vmatprep.subr.mxu0 0.0
    %1579 = vmatpush1.msra.mxu0 0.0
    %1580 = vmatprep.subr.mxu0 0.0
    %1581 = vmatpush1.msra.mxu0 0.0
    %1582 = vmatprep.subr.mxu0 0.0
    %1583 = vmatpush1.msra.mxu0 0.0
    %1584 = vmatprep.subr.mxu0 0.0
    %1585 = vmatpush1.msra.mxu0 0.0
    %1586 = vmatprep.subr.mxu0 0.0
    %1587 = vmatpush1.msra.mxu0 0.0
    %1588 = vmatprep.subr.mxu0 0.0
    %1589 = vmatpush1.msra.mxu0 0.0
    %1590 = vmatprep.subr.mxu0 0.0
    %1591 = vmatpush1.msra.mxu0 0.0
    %1592 = vmatprep.subr.mxu0 0.0
    %1593 = vmatpush1.msra.mxu0 0.0
    %1594 = vmatprep.subr.mxu0 0.0
    %1595 = vmatpush1.msra.mxu0 0.0
    %1596 = vmatprep.subr.mxu0 0.0
    %1597 = vmatpush1.msra.mxu0 0.0
    %1598 = vmatprep.mubr.f32.mxu0 0.0
    %v1599 = vand.u32 %v1066, 4294901760
    %1600 = vmatmul.mubr.f32.gmra.mrb[0].mxu0 %v1599
    %v1601 = vpop.f32.mrb[0].mxu0
    %v1602 = vadd.f32 %v1523, %v1601
    %v1603 = vpop.f32.mrb[0].mxu0
    %1604 = vdwg.mxu0
    %v1605 = vmax.f32 %v1602, 0.0
    %v1606 = vld [vmem:[%s7] sm:$0xff]
    %v1607 = vld [vmem:[%s7 + $0x8] sm:$0xff]
    %v1608 = vld [vmem:[%s7 + $0x10] sm:$0xff]
    %v1609 = vld [vmem:[%s7 + $0x18] sm:$0xff]
    %v1610 = vld [vmem:[%s8] sm:$0x1]
    %v1612 = vlaneseq
    %v1613 = vshrl.u32 %v1612, 7
    %v1614 = vsub.s32 0, %v1613
    %v1615 = vrot.slane %v1610, %v1614
    %vm1617 = vcmask 261120
    %v1619 = vsel %vm1617, %v1605, 0
    %1621 = vmatprep.subr.mxu0 0.0
    %v1622 = vand.u32 %v1606, 4294901760
    %1623 = vmatpush1.msra.mxu0 %v1622
    %1624 = vmatprep.subr.mxu0 0.0
    %v1625 = vand.u32 %v1607, 4294901760
    %1626 = vmatpush1.msra.mxu0 %v1625
    %1627 = vmatprep.subr.mxu0 0.0
    %v1628 = vand.u32 %v1608, 4294901760
    %1629 = vmatpush1.msra.mxu0 %v1628
    %1630 = vmatprep.subr.mxu0 0.0
    %v1631 = vand.u32 %v1609, 4294901760
    %1632 = vmatpush1.msra.mxu0 %v1631
    %1633 = vmatprep.subr.mxu0 0.0
    %1634 = vmatpush1.msra.mxu0 0.0
    %1635 = vmatprep.subr.mxu0 0.0
    %1636 = vmatpush1.msra.mxu0 0.0
    %1637 = vmatprep.subr.mxu0 0.0
    %1638 = vmatpush1.msra.mxu0 0.0
    %1639 = vmatprep.subr.mxu0 0.0
    %1640 = vmatpush1.msra.mxu0 0.0
    %1641 = vmatprep.subr.mxu0 0.0
    %1642 = vmatpush1.msra.mxu0 0.0
    %1643 = vmatprep.subr.mxu0 0.0
    %1644 = vmatpush1.msra.mxu0 0.0
    %1645 = vmatprep.subr.mxu0 0.0
    %1646 = vmatpush1.msra.mxu0 0.0
    %1647 = vmatprep.subr.mxu0 0.0
    %1648 = vmatpush1.msra.mxu0 0.0
    %1649 = vmatprep.subr.mxu0 0.0
    %1650 = vmatpush1.msra.mxu0 0.0
    %1651 = vmatprep.subr.mxu0 0.0
    %1652 = vmatpush1.msra.mxu0 0.0
    %1653 = vmatprep.subr.mxu0 0.0
    %1654 = vmatpush1.msra.mxu0 0.0
    %1655 = vmatprep.subr.mxu0 0.0
    %1656 = vmatpush1.msra.mxu0 0.0
    %1657 = vmatprep.subr.mxu0 0.0
    %1658 = vmatpush1.msra.mxu0 0.0
    %1659 = vmatprep.subr.mxu0 0.0
    %1660 = vmatpush1.msra.mxu0 0.0
    %1661 = vmatprep.subr.mxu0 0.0
    %1662 = vmatpush1.msra.mxu0 0.0
    %1663 = vmatprep.subr.mxu0 0.0
    %1664 = vmatpush1.msra.mxu0 0.0
    %1665 = vmatprep.subr.mxu0 0.0
    %1666 = vmatpush1.msra.mxu0 0.0
    %1667 = vmatprep.subr.mxu0 0.0
    %1668 = vmatpush1.msra.mxu0 0.0
    %1669 = vmatprep.subr.mxu0 0.0
    %1670 = vmatpush1.msra.mxu0 0.0
    %1671 = vmatprep.subr.mxu0 0.0
    %1672 = vmatpush1.msra.mxu0 0.0
    %1673 = vmatprep.subr.mxu0 0.0
    %1674 = vmatpush1.msra.mxu0 0.0
    %1675 = vmatprep.subr.mxu0 0.0
    %1676 = vmatpush1.msra.mxu0 0.0
    %1677 = vmatprep.subr.mxu0 0.0
    %1678 = vmatpush1.msra.mxu0 0.0
    %1679 = vmatprep.subr.mxu0 0.0
    %1680 = vmatpush1.msra.mxu0 0.0
    %1681 = vmatprep.subr.mxu0 0.0
    %1682 = vmatpush1.msra.mxu0 0.0
    %1683 = vmatprep.subr.mxu0 0.0
    %1684 = vmatpush1.msra.mxu0 0.0
    %1685 = vmatprep.subr.mxu0 0.0
    %1686 = vmatpush1.msra.mxu0 0.0
    %1687 = vmatprep.subr.mxu0 0.0
    %1688 = vmatpush1.msra.mxu0 0.0
    %1689 = vmatprep.mubr.f32.mxu0 0.0
    %v1690 = vand.u32 %v1619, 4294901760
    %v1691 = vsub.f32 %v1619, %v1690
    %v1692 = vand.u32 %v1691, 4294901760
    %v1693 = vsub.f32 %v1691, %v1692
    %v1694 = vand.u32 %v1693, 4294901760
    %1695 = vmatmul.mubr.f32.gmra.mrb[0].mxu0 %v1694
    %v1696 = vpop.f32.mrb[0].mxu0
    %v1697 = vadd.f32 %v1615, %v1696
    %v1698 = vpop.f32.mrb[0].mxu0
    %1699 = vdwg.mxu0
    %1700 = vmatprep.subr.mxu0 0.0
    %v1701 = vand.u32 %v1606, 4294901760
    %v1702 = vsub.f32 %v1606, %v1701
    %v1703 = vand.u32 %v1702, 4294901760
    %v1704 = vsub.f32 %v1702, %v1703
    %v1705 = vand.u32 %v1704, 4294901760
    %1706 = vmatpush1.msra.mxu0 %v1705
    %1707 = vmatprep.subr.mxu0 0.0
    %v1708 = vand.u32 %v1607, 4294901760
    %v1709 = vsub.f32 %v1607, %v1708
    %v1710 = vand.u32 %v1709, 4294901760
    %v1711 = vsub.f32 %v1709, %v1710
    %v1712 = vand.u32 %v1711, 4294901760
    %1713 = vmatpush1.msra.mxu0 %v1712
    %1714 = vmatprep.subr.mxu0 0.0
    %v1715 = vand.u32 %v1608, 4294901760
    %v1716 = vsub.f32 %v1608, %v1715
    %v1717 = vand.u32 %v1716, 4294901760
    %v1718 = vsub.f32 %v1716, %v1717
    %v1719 = vand.u32 %v1718, 4294901760
    %1720 = vmatpush1.msra.mxu0 %v1719
    %1721 = vmatprep.subr.mxu0 0.0
    %v1722 = vand.u32 %v1609, 4294901760
    %v1723 = vsub.f32 %v1609, %v1722
    %v1724 = vand.u32 %v1723, 4294901760
    %v1725 = vsub.f32 %v1723, %v1724
    %v1726 = vand.u32 %v1725, 4294901760
    %1727 = vmatpush1.msra.mxu0 %v1726
    %1728 = vmatprep.subr.mxu0 0.0
    %1729 = vmatpush1.msra.mxu0 0.0
    %1730 = vmatprep.subr.mxu0 0.0
    %1731 = vmatpush1.msra.mxu0 0.0
    %1732 = vmatprep.subr.mxu0 0.0
    %1733 = vmatpush1.msra.mxu0 0.0
    %1734 = vmatprep.subr.mxu0 0.0
    %1735 = vmatpush1.msra.mxu0 0.0
    %1736 = vmatprep.subr.mxu0 0.0
    %1737 = vmatpush1.msra.mxu0 0.0
    %1738 = vmatprep.subr.mxu0 0.0
    %1739 = vmatpush1.msra.mxu0 0.0
    %1740 = vmatprep.subr.mxu0 0.0
    %1741 = vmatpush1.msra.mxu0 0.0
    %1742 = vmatprep.subr.mxu0 0.0
    %1743 = vmatpush1.msra.mxu0 0.0
    %1744 = vmatprep.subr.mxu0 0.0
    %1745 = vmatpush1.msra.mxu0 0.0
    %1746 = vmatprep.subr.mxu0 0.0
    %1747 = vmatpush1.msra.mxu0 0.0
    %1748 = vmatprep.subr.mxu0 0.0
    %1749 = vmatpush1.msra.mxu0 0.0
    %1750 = vmatprep.subr.mxu0 0.0
    %1751 = vmatpush1.msra.mxu0 0.0
    %1752 = vmatprep.subr.mxu0 0.0
    %1753 = vmatpush1.msra.mxu0 0.0
    %1754 = vmatprep.subr.mxu0 0.0
    %1755 = vmatpush1.msra.mxu0 0.0
    %1756 = vmatprep.subr.mxu0 0.0
    %1757 = vmatpush1.msra.mxu0 0.0
    %1758 = vmatprep.subr.mxu0 0.0
    %1759 = vmatpush1.msra.mxu0 0.0
    %1760 = vmatprep.subr.mxu0 0.0
    %1761 = vmatpush1.msra.mxu0 0.0
    %1762 = vmatprep.subr.mxu0 0.0
    %1763 = vmatpush1.msra.mxu0 0.0
    %1764 = vmatprep.subr.mxu0 0.0
    %1765 = vmatpush1.msra.mxu0 0.0
    %1766 = vmatprep.subr.mxu0 0.0
    %1767 = vmatpush1.msra.mxu0 0.0
    %1768 = vmatprep.subr.mxu0 0.0
    %1769 = vmatpush1.msra.mxu0 0.0
    %1770 = vmatprep.subr.mxu0 0.0
    %1771 = vmatpush1.msra.mxu0 0.0
    %1772 = vmatprep.subr.mxu0 0.0
    %1773 = vmatpush1.msra.mxu0 0.0
    %1774 = vmatprep.subr.mxu0 0.0
    %1775 = vmatpush1.msra.mxu0 0.0
    %1776 = vmatprep.subr.mxu0 0.0
    %1777 = vmatpush1.msra.mxu0 0.0
    %1778 = vmatprep.subr.mxu0 0.0
    %1779 = vmatpush1.msra.mxu0 0.0
    %1780 = vmatprep.subr.mxu0 0.0
    %1781 = vmatpush1.msra.mxu0 0.0
    %1782 = vmatprep.subr.mxu0 0.0
    %1783 = vmatpush1.msra.mxu0 0.0
    %1784 = vmatprep.mubr.f32.mxu0 0.0
    %v1785 = vand.u32 %v1619, 4294901760
    %1786 = vmatmul.mubr.f32.gmra.mrb[0].mxu0 %v1785
    %v1787 = vpop.f32.mrb[0].mxu0
    %v1788 = vadd.f32 %v1697, %v1787
    %v1789 = vpop.f32.mrb[0].mxu0
    %1790 = vdwg.mxu0
    %1791 = vmatprep.subr.mxu0 0.0
    %v1792 = vand.u32 %v1606, 4294901760
    %v1793 = vsub.f32 %v1606, %v1792
    %1794 = vmatpush1.msra.mxu0 %v1793
    %1795 = vmatprep.subr.mxu0 0.0
    %v1796 = vand.u32 %v1607, 4294901760
    %v1797 = vsub.f32 %v1607, %v1796
    %1798 = vmatpush1.msra.mxu0 %v1797
    %1799 = vmatprep.subr.mxu0 0.0
    %v1800 = vand.u32 %v1608, 4294901760
    %v1801 = vsub.f32 %v1608, %v1800
    %1802 = vmatpush1.msra.mxu0 %v1801
    %1803 = vmatprep.subr.mxu0 0.0
    %v1804 = vand.u32 %v1609, 4294901760
    %v1805 = vsub.f32 %v1609, %v1804
    %1806 = vmatpush1.msra.mxu0 %v1805
    %1807 = vmatprep.subr.mxu0 0.0
    %1808 = vmatpush1.msra.mxu0 0.0
    %1809 = vmatprep.subr.mxu0 0.0
    %1810 = vmatpush1.msra.mxu0 0.0
    %1811 = vmatprep.subr.mxu0 0.0
    %1812 = vmatpush1.msra.mxu0 0.0
    %1813 = vmatprep.subr.mxu0 0.0
    %1814 = vmatpush1.msra.mxu0 0.0
    %1815 = vmatprep.subr.mxu0 0.0
    %1816 = vmatpush1.msra.mxu0 0.0
    %1817 = vmatprep.subr.mxu0 0.0
    %1818 = vmatpush1.msra.mxu0 0.0
    %1819 = vmatprep.subr.mxu0 0.0
    %1820 = vmatpush1.msra.mxu0 0.0
    %1821 = vmatprep.subr.mxu0 0.0
    %1822 = vmatpush1.msra.mxu0 0.0
    %1823 = vmatprep.subr.mxu0 0.0
    %1824 = vmatpush1.msra.mxu0 0.0
    %1825 = vmatprep.subr.mxu0 0.0
    %1826 = vmatpush1.msra.mxu0 0.0
    %1827 = vmatprep.subr.mxu0 0.0
    %1828 = vmatpush1.msra.mxu0 0.0
    %1829 = vmatprep.subr.mxu0 0.0
    %1830 = vmatpush1.msra.mxu0 0.0
    %1831 = vmatprep.subr.mxu0 0.0
    %1832 = vmatpush1.msra.mxu0 0.0
    %1833 = vmatprep.subr.mxu0 0.0
    %1834 = vmatpush1.msra.mxu0 0.0
    %1835 = vmatprep.subr.mxu0 0.0
    %1836 = vmatpush1.msra.mxu0 0.0
    %1837 = vmatprep.subr.mxu0 0.0
    %1838 = vmatpush1.msra.mxu0 0.0
    %1839 = vmatprep.subr.mxu0 0.0
    %1840 = vmatpush1.msra.mxu0 0.0
    %1841 = vmatprep.subr.mxu0 0.0
    %1842 = vmatpush1.msra.mxu0 0.0
    %1843 = vmatprep.subr.mxu0 0.0
    %1844 = vmatpush1.msra.mxu0 0.0
    %1845 = vmatprep.subr.mxu0 0.0
    %1846 = vmatpush1.msra.mxu0 0.0
    %1847 = vmatprep.subr.mxu0 0.0
    %1848 = vmatpush1.msra.mxu0 0.0
    %1849 = vmatprep.subr.mxu0 0.0
    %1850 = vmatpush1.msra.mxu0 0.0
    %1851 = vmatprep.subr.mxu0 0.0
    %1852 = vmatpush1.msra.mxu0 0.0
    %1853 = vmatprep.subr.mxu0 0.0
    %1854 = vmatpush1.msra.mxu0 0.0
    %1855 = vmatprep.subr.mxu0 0.0
    %1856 = vmatpush1.msra.mxu0 0.0
    %1857 = vmatprep.subr.mxu0 0.0
    %1858 = vmatpush1.msra.mxu0 0.0
    %1859 = vmatprep.subr.mxu0 0.0
    %1860 = vmatpush1.msra.mxu0 0.0
    %1861 = vmatprep.subr.mxu0 0.0
    %1862 = vmatpush1.msra.mxu0 0.0
    %1863 = vmatprep.mubr.f32.mxu0 0.0
    %v1864 = vand.u32 %v1619, 4294901760
    %v1865 = vsub.f32 %v1619, %v1864
    %1866 = vmatmul.mubr.f32.gmra.mrb[0].mxu0 %v1865
    %v1867 = vpop.f32.mrb[0].mxu0
    %v1868 = vadd.f32 %v1788, %v1867
    %v1869 = vpop.f32.mrb[0].mxu0
    %1870 = vdwg.mxu0
    %1871 = vmatprep.subr.mxu0 0.0
    %v1872 = vand.u32 %v1606, 4294901760
    %1873 = vmatpush1.msra.mxu0 %v1872
    %1874 = vmatprep.subr.mxu0 0.0
    %v1875 = vand.u32 %v1607, 4294901760
    %1876 = vmatpush1.msra.mxu0 %v1875
    %1877 = vmatprep.subr.mxu0 0.0
    %v1878 = vand.u32 %v1608, 4294901760
    %1879 = vmatpush1.msra.mxu0 %v1878
    %1880 = vmatprep.subr.mxu0 0.0
    %v1881 = vand.u32 %v1609, 4294901760
    %1882 = vmatpush1.msra.mxu0 %v1881
    %1883 = vmatprep.subr.mxu0 0.0
    %1884 = vmatpush1.msra.mxu0 0.0
    %1885 = vmatprep.subr.mxu0 0.0
    %1886 = vmatpush1.msra.mxu0 0.0
    %1887 = vmatprep.subr.mxu0 0.0
    %1888 = vmatpush1.msra.mxu0 0.0
    %1889 = vmatprep.subr.mxu0 0.0
    %1890 = vmatpush1.msra.mxu0 0.0
    %1891 = vmatprep.subr.mxu0 0.0
    %1892 = vmatpush1.msra.mxu0 0.0
    %1893 = vmatprep.subr.mxu0 0.0
    %1894 = vmatpush1.msra.mxu0 0.0
    %1895 = vmatprep.subr.mxu0 0.0
    %1896 = vmatpush1.msra.mxu0 0.0
    %1897 = vmatprep.subr.mxu0 0.0
    %1898 = vmatpush1.msra.mxu0 0.0
    %1899 = vmatprep.subr.mxu0 0.0
    %1900 = vmatpush1.msra.mxu0 0.0
    %1901 = vmatprep.subr.mxu0 0.0
    %1902 = vmatpush1.msra.mxu0 0.0
    %1903 = vmatprep.subr.mxu0 0.0
    %1904 = vmatpush1.msra.mxu0 0.0
    %1905 = vmatprep.subr.mxu0 0.0
    %1906 = vmatpush1.msra.mxu0 0.0
    %1907 = vmatprep.subr.mxu0 0.0
    %1908 = vmatpush1.msra.mxu0 0.0
    %1909 = vmatprep.subr.mxu0 0.0
    %1910 = vmatpush1.msra.mxu0 0.0
    %1911 = vmatprep.subr.mxu0 0.0
    %1912 = vmatpush1.msra.mxu0 0.0
    %1913 = vmatprep.subr.mxu0 0.0
    %1914 = vmatpush1.msra.mxu0 0.0
    %1915 = vmatprep.subr.mxu0 0.0
    %1916 = vmatpush1.msra.mxu0 0.0
    %1917 = vmatprep.subr.mxu0 0.0
    %1918 = vmatpush1.msra.mxu0 0.0
    %1919 = vmatprep.subr.mxu0 0.0
    %1920 = vmatpush1.msra.mxu0 0.0
    %1921 = vmatprep.subr.mxu0 0.0
    %1922 = vmatpush1.msra.mxu0 0.0
    %1923 = vmatprep.subr.mxu0 0.0
    %1924 = vmatpush1.msra.mxu0 0.0
    %1925 = vmatprep.subr.mxu0 0.0
    %1926 = vmatpush1.msra.mxu0 0.0
    %1927 = vmatprep.subr.mxu0 0.0
    %1928 = vmatpush1.msra.mxu0 0.0
    %1929 = vmatprep.subr.mxu0 0.0
    %1930 = vmatpush1.msra.mxu0 0.0
    %1931 = vmatprep.subr.mxu0 0.0
    %1932 = vmatpush1.msra.mxu0 0.0
    %1933 = vmatprep.subr.mxu0 0.0
    %1934 = vmatpush1.msra.mxu0 0.0
    %1935 = vmatprep.subr.mxu0 0.0
    %1936 = vmatpush1.msra.mxu0 0.0
    %1937 = vmatprep.subr.mxu0 0.0
    %1938 = vmatpush1.msra.mxu0 0.0
    %1939 = vmatprep.mubr.f32.mxu0 0.0
    %v1940 = vand.u32 %v1619, 4294901760
    %v1941 = vsub.f32 %v1619, %v1940
    %v1942 = vand.u32 %v1941, 4294901760
    %1943 = vmatmul.mubr.f32.gmra.mrb[0].mxu0 %v1942
    %v1944 = vpop.f32.mrb[0].mxu0
    %v1945 = vadd.f32 %v1868, %v1944
    %v1946 = vpop.f32.mrb[0].mxu0
    %1947 = vdwg.mxu0
    %1948 = vmatprep.subr.mxu0 0.0
    %v1949 = vand.u32 %v1606, 4294901760
    %v1950 = vsub.f32 %v1606, %v1949
    %v1951 = vand.u32 %v1950, 4294901760
    %1952 = vmatpush1.msra.mxu0 %v1951
    %1953 = vmatprep.subr.mxu0 0.0
    %v1954 = vand.u32 %v1607, 4294901760
    %v1955 = vsub.f32 %v1607, %v1954
    %v1956 = vand.u32 %v1955, 4294901760
    %1957 = vmatpush1.msra.mxu0 %v1956
    %1958 = vmatprep.subr.mxu0 0.0
    %v1959 = vand.u32 %v1608, 4294901760
    %v1960 = vsub.f32 %v1608, %v1959
    %v1961 = vand.u32 %v1960, 4294901760
    %1962 = vmatpush1.msra.mxu0 %v1961
    %1963 = vmatprep.subr.mxu0 0.0
    %v1964 = vand.u32 %v1609, 4294901760
    %v1965 = vsub.f32 %v1609, %v1964
    %v1966 = vand.u32 %v1965, 4294901760
    %1967 = vmatpush1.msra.mxu0 %v1966
    %1968 = vmatprep.subr.mxu0 0.0
    %1969 = vmatpush1.msra.mxu0 0.0
    %1970 = vmatprep.subr.mxu0 0.0
    %1971 = vmatpush1.msra.mxu0 0.0
    %1972 = vmatprep.subr.mxu0 0.0
    %1973 = vmatpush1.msra.mxu0 0.0
    %1974 = vmatprep.subr.mxu0 0.0
    %1975 = vmatpush1.msra.mxu0 0.0
    %1976 = vmatprep.subr.mxu0 0.0
    %1977 = vmatpush1.msra.mxu0 0.0
    %1978 = vmatprep.subr.mxu0 0.0
    %1979 = vmatpush1.msra.mxu0 0.0
    %1980 = vmatprep.subr.mxu0 0.0
    %1981 = vmatpush1.msra.mxu0 0.0
    %1982 = vmatprep.subr.mxu0 0.0
    %1983 = vmatpush1.msra.mxu0 0.0
    %1984 = vmatprep.subr.mxu0 0.0
    %1985 = vmatpush1.msra.mxu0 0.0
    %1986 = vmatprep.subr.mxu0 0.0
    %1987 = vmatpush1.msra.mxu0 0.0
    %1988 = vmatprep.subr.mxu0 0.0
    %1989 = vmatpush1.msra.mxu0 0.0
    %1990 = vmatprep.subr.mxu0 0.0
    %1991 = vmatpush1.msra.mxu0 0.0
    %1992 = vmatprep.subr.mxu0 0.0
    %1993 = vmatpush1.msra.mxu0 0.0
    %1994 = vmatprep.subr.mxu0 0.0
    %1995 = vmatpush1.msra.mxu0 0.0
    %1996 = vmatprep.subr.mxu0 0.0
    %1997 = vmatpush1.msra.mxu0 0.0
    %1998 = vmatprep.subr.mxu0 0.0
    %1999 = vmatpush1.msra.mxu0 0.0
    %2000 = vmatprep.subr.mxu0 0.0
    %2001 = vmatpush1.msra.mxu0 0.0
    %2002 = vmatprep.subr.mxu0 0.0
    %2003 = vmatpush1.msra.mxu0 0.0
    %2004 = vmatprep.subr.mxu0 0.0
    %2005 = vmatpush1.msra.mxu0 0.0
    %2006 = vmatprep.subr.mxu0 0.0
    %2007 = vmatpush1.msra.mxu0 0.0
    %2008 = vmatprep.subr.mxu0 0.0
    %2009 = vmatpush1.msra.mxu0 0.0
    %2010 = vmatprep.subr.mxu0 0.0
    %2011 = vmatpush1.msra.mxu0 0.0
    %2012 = vmatprep.subr.mxu0 0.0
    %2013 = vmatpush1.msra.mxu0 0.0
    %2014 = vmatprep.subr.mxu0 0.0
    %2015 = vmatpush1.msra.mxu0 0.0
    %2016 = vmatprep.subr.mxu0 0.0
    %2017 = vmatpush1.msra.mxu0 0.0
    %2018 = vmatprep.subr.mxu0 0.0
    %2019 = vmatpush1.msra.mxu0 0.0
    %2020 = vmatprep.subr.mxu0 0.0
    %2021 = vmatpush1.msra.mxu0 0.0
    %2022 = vmatprep.subr.mxu0 0.0
    %2023 = vmatpush1.msra.mxu0 0.0
    %2024 = vmatprep.mubr.f32.mxu0 0.0
    %v2025 = vand.u32 %v1619, 4294901760
    %2026 = vmatmul.mubr.f32.gmra.mrb[0].mxu0 %v2025
    %v2027 = vpop.f32.mrb[0].mxu0
    %v2028 = vadd.f32 %v1945, %v2027
    %v2029 = vpop.f32.mrb[0].mxu0
    %2030 = vdwg.mxu0
    %2031 = vmatprep.subr.mxu0 0.0
    %v2032 = vand.u32 %v1606, 4294901760
    %2033 = vmatpush1.msra.mxu0 %v2032
    %2034 = vmatprep.subr.mxu0 0.0
    %v2035 = vand.u32 %v1607, 4294901760
    %2036 = vmatpush1.msra.mxu0 %v2035
    %2037 = vmatprep.subr.mxu0 0.0
    %v2038 = vand.u32 %v1608, 4294901760
    %2039 = vmatpush1.msra.mxu0 %v2038
    %2040 = vmatprep.subr.mxu0 0.0
    %v2041 = vand.u32 %v1609, 4294901760
    %2042 = vmatpush1.msra.mxu0 %v2041
    %2043 = vmatprep.subr.mxu0 0.0
    %2044 = vmatpush1.msra.mxu0 0.0
    %2045 = vmatprep.subr.mxu0 0.0
    %2046 = vmatpush1.msra.mxu0 0.0
    %2047 = vmatprep.subr.mxu0 0.0
    %2048 = vmatpush1.msra.mxu0 0.0
    %2049 = vmatprep.subr.mxu0 0.0
    %2050 = vmatpush1.msra.mxu0 0.0
    %2051 = vmatprep.subr.mxu0 0.0
    %2052 = vmatpush1.msra.mxu0 0.0
    %2053 = vmatprep.subr.mxu0 0.0
    %2054 = vmatpush1.msra.mxu0 0.0
    %2055 = vmatprep.subr.mxu0 0.0
    %2056 = vmatpush1.msra.mxu0 0.0
    %2057 = vmatprep.subr.mxu0 0.0
    %2058 = vmatpush1.msra.mxu0 0.0
    %2059 = vmatprep.subr.mxu0 0.0
    %2060 = vmatpush1.msra.mxu0 0.0
    %2061 = vmatprep.subr.mxu0 0.0
    %2062 = vmatpush1.msra.mxu0 0.0
    %2063 = vmatprep.subr.mxu0 0.0
    %2064 = vmatpush1.msra.mxu0 0.0
    %2065 = vmatprep.subr.mxu0 0.0
    %2066 = vmatpush1.msra.mxu0 0.0
    %2067 = vmatprep.subr.mxu0 0.0
    %2068 = vmatpush1.msra.mxu0 0.0
    %2069 = vmatprep.subr.mxu0 0.0
    %2070 = vmatpush1.msra.mxu0 0.0
    %2071 = vmatprep.subr.mxu0 0.0
    %2072 = vmatpush1.msra.mxu0 0.0
    %2073 = vmatprep.subr.mxu0 0.0
    %2074 = vmatpush1.msra.mxu0 0.0
    %2075 = vmatprep.subr.mxu0 0.0
    %2076 = vmatpush1.msra.mxu0 0.0
    %2077 = vmatprep.subr.mxu0 0.0
    %2078 = vmatpush1.msra.mxu0 0.0
    %2079 = vmatprep.subr.mxu0 0.0
    %2080 = vmatpush1.msra.mxu0 0.0
    %2081 = vmatprep.subr.mxu0 0.0
    %2082 = vmatpush1.msra.mxu0 0.0
    %2083 = vmatprep.subr.mxu0 0.0
    %2084 = vmatpush1.msra.mxu0 0.0
    %2085 = vmatprep.subr.mxu0 0.0
    %2086 = vmatpush1.msra.mxu0 0.0
    %2087 = vmatprep.subr.mxu0 0.0
    %2088 = vmatpush1.msra.mxu0 0.0
    %2089 = vmatprep.subr.mxu0 0.0
    %2090 = vmatpush1.msra.mxu0 0.0
    %2091 = vmatprep.subr.mxu0 0.0
    %2092 = vmatpush1.msra.mxu0 0.0
    %2093 = vmatprep.subr.mxu0 0.0
    %2094 = vmatpush1.msra.mxu0 0.0
    %2095 = vmatprep.subr.mxu0 0.0
    %2096 = vmatpush1.msra.mxu0 0.0
    %2097 = vmatprep.subr.mxu0 0.0
    %2098 = vmatpush1.msra.mxu0 0.0
    %2099 = vmatprep.mubr.f32.mxu0 0.0
    %v2100 = vand.u32 %v1619, 4294901760
    %2101 = vmatmul.mubr.f32.gmra.mrb[0].mxu0 %v2100
    %v2102 = vpop.f32.mrb[0].mxu0
    %v2103 = vadd.f32 %v2028, %v2102
    %v2104 = vpop.f32.mrb[0].mxu0
    %2105 = vdwg.mxu0
    %2106 = vst [vmem:[#allocation2] sm:$0x3] %v2103
    // Predicated region
    $region38: #{dqn_forward.1} parent=1 // pred_check
      _
    $region39: #{dqn_forward.1} parent=1 // pred_check_branch
      %2108 = sbr.rel (0) target = $region41
    $region40: #{dqn_forward.1} parent=1 // pred_region
      %s2110 = ssub.s32 32, 32
      %2111 = vsyncadd [#allocation3], %s2110
      %s2113 = sshll.u32 [#allocation2], 4
      %s2114 = int_to_ptr.vmem [resolvable:$true] %s2113
      %2116 = dma.vmem_to_hbm [thread:$0]  %s2114, 32, %s9, [#allocation3]
    $region41: #{dqn_forward.1} parent=1 // pred_fallthru
      _
    // Predicated region
    $region42: #{dqn_forward.1} parent=1 // pred_check
      _
    $region43: #{dqn_forward.1} parent=1 // pred_check_branch
      %2118 = sbr.rel (0) target = $region45
    $region44: #{dqn_forward.1} parent=1 // pred_region
      %2119 = dma.done [#allocation3], 32
    $region45: #{dqn_forward.1} parent=1 // pred_fallthru
      _
    %2120 = vsyncpa [#allocation3], 1

</llo_original>
